<compile_context>
chip_gen: v5e
topology: v5e:2x2
jax: 0.10.0
libtpu: 0.0.40
codegen_flags: <defaults>
</compile_context>

<pallas_src>
import functools
import math

import jax
import jax.numpy as jnp
from jax.experimental import pallas as pl
from jax.experimental.pallas import tpu as pltpu


def _attention_kernel(x_ref, kv_ref, wq_ref, wk_ref, wv_ref, wo_ref, bo_ref,
                      o_ref, acc_ref, *, scale):
    """One (batch, head) step: per-head projection + attention + accum."""
    h = pl.program_id(1)

    @pl.when(h == 0)
    def _init():
        acc_ref[...] = jnp.zeros_like(acc_ref)

    x = x_ref[0]        # (T, D)
    kv = kv_ref[0]      # (T, D)

    # Per-head projections: the BlockSpec index_map already selected this
    # head's columns of Wq / Wk / Wv, so these are plain 2-D MXU matmuls.
    q = jnp.dot(x, wq_ref[...], preferred_element_type=jnp.float32)    # (T, E)
    k = jnp.dot(kv, wk_ref[...], preferred_element_type=jnp.float32)   # (T, E)
    v = jnp.dot(kv, wv_ref[...], preferred_element_type=jnp.float32)   # (T, E)

    # scores = q @ k^T * e^-0.5, softmax over keys.
    scores = jax.lax.dot_general(
        q, k, (((1,), (1,)), ((), ())),
        preferred_element_type=jnp.float32) * scale                    # (T, T)
    m = jnp.max(scores, axis=-1, keepdims=True)
    p = jnp.exp(scores - m)
    p = p / jnp.sum(p, axis=-1, keepdims=True)

    attn = jnp.dot(p, v, preferred_element_type=jnp.float32)           # (T, E)

    # This head's contribution to the output projection, accumulated over
    # the heads axis of the grid:  out @ Wo == sum_h attn_h @ Wo[h*E:(h+1)*E].
    acc_ref[...] += jnp.dot(attn, wo_ref[...],
                            preferred_element_type=jnp.float32)        # (T, D)

    @pl.when(h == pl.num_programs(1) - 1)
    def _finalize():
        o_ref[0] = (acc_ref[...] + bo_ref[...]).astype(o_ref.dtype)


def self_attention_forward(x, params, *, heads, kv=None):
    """x: [B, T, D]. params = (wq [D,HE], wkv [D,2HE], wo [HE,D], bo [D])."""
    wq, wkv, wo, bo = params
    B, T, D = x.shape
    HE = wq.shape[1]
    assert HE % heads == 0
    E = HE // heads
    kv_in = x if kv is None else kv

    # Split the fused kv projection into K / V column blocks (outside the
    # kernel; mathematically identical to chunk(2, dim=-1) after the matmul).
    wk = wkv[:, :HE]
    wv = wkv[:, HE:]
    bo2d = bo.reshape(1, D)

    kernel = functools.partial(_attention_kernel, scale=float(E) ** -0.5)

    out = pl.pallas_call(
        kernel,
        out_shape=jax.ShapeDtypeStruct((B, T, D), x.dtype),
        grid=(B, heads),
        in_specs=[
            pl.BlockSpec((1, T, D), lambda b, h: (b, 0, 0)),   # x   (resident over h)
            pl.BlockSpec((1, T, D), lambda b, h: (b, 0, 0)),   # kv  (resident over h)
            pl.BlockSpec((D, E), lambda b, h: (0, h)),         # Wq head slice
            pl.BlockSpec((D, E), lambda b, h: (0, h)),         # Wk head slice
            pl.BlockSpec((D, E), lambda b, h: (0, h)),         # Wv head slice
            pl.BlockSpec((E, D), lambda b, h: (h, 0)),         # Wo head rows
            pl.BlockSpec((1, D), lambda b, h: (0, 0)),         # bias (resident)
        ],
        out_specs=pl.BlockSpec((1, T, D), lambda b, h: (b, 0, 0)),
        scratch_shapes=[pltpu.VMEM((T, D), jnp.float32)],      # f32 accumulator
        compiler_params=pltpu.CompilerParams(
            dimension_semantics=("parallel", "arbitrary"),
        ),
    )(x, kv_in, wq, wk, wv, wo, bo2d)
    return out


class SelfAttention:
    """JAX/Pallas analogue of the PyTorch SelfAttention module."""

    def __init__(self, dim, heads, dim_heads=None, *, key):
        self.dim_heads = dim // heads if dim_heads is None else dim_heads
        self.heads = heads
        dim_hidden = self.dim_heads * heads
        k1, k2, k3, k4 = jax.random.split(key, 4)
        # PyTorch nn.Linear default init: U(-1/sqrt(fan_in), 1/sqrt(fan_in)).
        bq = 1.0 / math.sqrt(dim)
        bo_b = 1.0 / math.sqrt(dim_hidden)
        # Weights stored as [in, out] (the transpose of torch's [out, in]).
        self.wq = jax.random.uniform(k1, (dim, dim_hidden), jnp.float32, -bq, bq)
        self.wkv = jax.random.uniform(k2, (dim, 2 * dim_hidden), jnp.float32, -bq, bq)
        self.wo = jax.random.uniform(k3, (dim_hidden, dim), jnp.float32, -bo_b, bo_b)
        self.bo = jax.random.uniform(k4, (dim,), jnp.float32, -bo_b, bo_b)

    @property
    def params(self):
        return (self.wq, self.wkv, self.wo, self.bo)

    def __call__(self, x, kv=None):
        return self_attention_forward(x, self.params, heads=self.heads, kv=kv)


def self_attention_reference(x, params, heads, kv=None):
    """Pure-JAX mirror of the PyTorch forward (for correctness check)."""
    wq, wkv, wo, bo = params
    kv_in = x if kv is None else kv
    b, t, d_in = x.shape
    he = wq.shape[1]
    e = he // heads
    q = x @ wq
    k, v = jnp.split(kv_in @ wkv, 2, axis=-1)

    def merge(z):
        return z.reshape(b, -1, heads, e).transpose(0, 2, 1, 3).reshape(b * heads, -1, e)

    q, k, v = map(merge, (q, k, v))
    dots = jnp.einsum('bie,bje->bij', q, k) * e ** -0.5
    dots = jax.nn.softmax(dots, axis=-1)
    out = jnp.einsum('bij,bje->bie', dots, v)
    out = out.reshape(b, heads, -1, e).transpose(0, 2, 1, 3).reshape(b, -1, he)
    return out @ wo + bo


if __name__ == "__main__":
    # Small but lane-dense config: dim_heads = dim // heads = 128, so every
    # block's last dim is a multiple of 128 (no masked partial stores).
    B, T, DIM, HEADS = 2, 128, 256, 2

    key = jax.random.PRNGKey(0)
    kx, kp = jax.random.split(key)
    x = jax.random.normal(kx, (B, T, DIM), jnp.float32)

    attn = SelfAttention(DIM, HEADS, key=kp)

    y = attn(x)
    y = jax.block_until_ready(y)
    assert y.shape == (B, T, DIM)

    y_ref = self_attention_reference(x, attn.params, HEADS)
    assert bool(jnp.allclose(y, y_ref, atol=1e-3, rtol=1e-3)), \
        "Pallas SelfAttention does not match reference"

    print("KERNEL_OK")
</pallas_src>

<mosaic_0001>
module attributes {stable_mosaic.version = 11 : i64} {
  func.func @_attention_kernel(%arg0: i32, %arg1: i32, %arg2: memref<1x128x256xf32, #tpu.memory_space<vmem>>, %arg3: memref<1x128x256xf32, #tpu.memory_space<vmem>>, %arg4: memref<256x128xf32, #tpu.memory_space<vmem>>, %arg5: memref<256x128xf32, #tpu.memory_space<vmem>>, %arg6: memref<256x128xf32, #tpu.memory_space<vmem>>, %arg7: memref<128x256xf32, #tpu.memory_space<vmem>>, %arg8: memref<1x256xf32, #tpu.memory_space<vmem>>, %arg9: memref<1x128x256xf32, #tpu.memory_space<vmem>>, %arg10: memref<128x256xf32, #tpu.memory_space<vmem>>) attributes {dimension_semantics = [#tpu.dimension_semantics<parallel>, #tpu.dimension_semantics<arbitrary>], iteration_bounds = array<i64: 2, 2>, scalar_prefetch = 0 : i64, scratch_operands = 1 : i64, tpu.core_type = #tpu.core_type<tc>, window_params = [{transform_indices = @transform_0, window_bounds = array<i64: 1, 128, 256>}, {transform_indices = @transform_1, window_bounds = array<i64: 1, 128, 256>}, {transform_indices = @transform_2, window_bounds = array<i64: 256, 128>}, {transform_indices = @transform_3, window_bounds = array<i64: 256, 128>}, {transform_indices = @transform_4, window_bounds = array<i64: 256, 128>}, {transform_indices = @transform_5, window_bounds = array<i64: 128, 256>}, {pipeline_mode = #tpu.pipeline_mode<synchronous>, transform_indices = @transform_6, window_bounds = array<i64: 1, 256>}, {transform_indices = @transform_7, window_bounds = array<i64: 1, 128, 256>}]} {
    %c0_i32 = arith.constant 0 : i32
    %0 = arith.cmpi eq, %arg1, %c0_i32 : i32
    %1 = arith.extui %0 : i1 to i32
    %c0_i32_0 = arith.constant 0 : i32
    %2 = arith.cmpi ne, %1, %c0_i32_0 : i32
    scf.if %2 {
      %cst_27 = arith.constant 0.000000e+00 : f32
      %34 = vector.broadcast %cst_27 : f32 to vector<128x256xf32>
      %c0_28 = arith.constant 0 : index
      %c0_29 = arith.constant 0 : index
      %35 = vector.load %arg10[%c0_28, %c0_29] : memref<128x256xf32, #tpu.memory_space<vmem>>, vector<128x256xf32>
      tpu.vector_store %arg10[%c0_28, %c0_29], %34 {strides = array<i32>} : memref<128x256xf32, #tpu.memory_space<vmem>>, vector<128x256xf32>,
    } else {
    }
    %c0 = arith.constant 0 : index
    %c0_1 = arith.constant 0 : index
    %c0_2 = arith.constant 0 : index
    %3 = vector.load %arg2[%c0, %c0_1, %c0_2] : memref<1x128x256xf32, #tpu.memory_space<vmem>>, vector<1x128x256xf32>
    %4 = vector.shape_cast %3 : vector<1x128x256xf32> to vector<128x256xf32>
    %c0_3 = arith.constant 0 : index
    %c0_4 = arith.constant 0 : index
    %c0_5 = arith.constant 0 : index
    %5 = vector.load %arg3[%c0_3, %c0_4, %c0_5] : memref<1x128x256xf32, #tpu.memory_space<vmem>>, vector<1x128x256xf32>
    %6 = vector.shape_cast %5 : vector<1x128x256xf32> to vector<128x256xf32>
    %c0_6 = arith.constant 0 : index
    %c0_7 = arith.constant 0 : index
    %7 = vector.load %arg4[%c0_6, %c0_7] : memref<256x128xf32, #tpu.memory_space<vmem>>, vector<256x128xf32>
    %cst = arith.constant dense<0.000000e+00> : vector<128x128xf32>
    %8 = tpu.matmul %4, %7, %cst {dimension_numbers = #tpu.dot_dimension_numbers<[1], [0], [0], [1], [0, 0, 1, 1], [], []>} : vector<128x256xf32>, vector<256x128xf32>, vector<128x128xf32> -> vector<128x128xf32>
    %c0_8 = arith.constant 0 : index
    %c0_9 = arith.constant 0 : index
    %9 = vector.load %arg5[%c0_8, %c0_9] : memref<256x128xf32, #tpu.memory_space<vmem>>, vector<256x128xf32>
    %cst_10 = arith.constant dense<0.000000e+00> : vector<128x128xf32>
    %10 = tpu.matmul %6, %9, %cst_10 {dimension_numbers = #tpu.dot_dimension_numbers<[1], [0], [0], [1], [0, 0, 1, 1], [], []>} : vector<128x256xf32>, vector<256x128xf32>, vector<128x128xf32> -> vector<128x128xf32>
    %c0_11 = arith.constant 0 : index
    %c0_12 = arith.constant 0 : index
    %11 = vector.load %arg6[%c0_11, %c0_12] : memref<256x128xf32, #tpu.memory_space<vmem>>, vector<256x128xf32>
    %cst_13 = arith.constant dense<0.000000e+00> : vector<128x128xf32>
    %12 = tpu.matmul %6, %11, %cst_13 {dimension_numbers = #tpu.dot_dimension_numbers<[1], [0], [0], [1], [0, 0, 1, 1], [], []>} : vector<128x256xf32>, vector<256x128xf32>, vector<128x128xf32> -> vector<128x128xf32>
    %cst_14 = arith.constant dense<0.000000e+00> : vector<128x128xf32>
    %13 = tpu.matmul %8, %10, %cst_14 {dimension_numbers = #tpu.dot_dimension_numbers<[1], [1], [0], [0], [0, 0, 1, 0], [], []>} : vector<128x128xf32>, vector<128x128xf32>, vector<128x128xf32> -> vector<128x128xf32>
    %cst_15 = arith.constant 0.0883883461 : f32
    %14 = vector.broadcast %cst_15 : f32 to vector<128x128xf32>
    %15 = arith.mulf %13, %14 : vector<128x128xf32>
    %cst_16 = arith.constant dense<0xFF800000> : vector<128xf32>
    %16 = vector.multi_reduction <maximumf>, %15, %cst_16 [1] : vector<128x128xf32> to vector<128xf32>
    %17 = vector.shape_cast %16 : vector<128xf32> to vector<128x1xf32>
    %18 = vector.broadcast %17 : vector<128x1xf32> to vector<128x128xf32>
    %19 = arith.subf %15, %18 : vector<128x128xf32>
    %20 = math.exp %19 : vector<128x128xf32>
    %cst_17 = arith.constant dense<0.000000e+00> : vector<128xf32>
    %21 = vector.multi_reduction <add>, %20, %cst_17 [1] : vector<128x128xf32> to vector<128xf32>
    %22 = vector.shape_cast %21 : vector<128xf32> to vector<128x1xf32>
    %23 = vector.broadcast %22 : vector<128x1xf32> to vector<128x128xf32>
    %24 = arith.divf %20, %23 : vector<128x128xf32>
    %cst_18 = arith.constant dense<0.000000e+00> : vector<128x128xf32>
    %25 = tpu.matmul %24, %12, %cst_18 {dimension_numbers = #tpu.dot_dimension_numbers<[1], [0], [0], [1], [0, 0, 1, 1], [], []>} : vector<128x128xf32>, vector<128x128xf32>, vector<128x128xf32> -> vector<128x128xf32>
    %c0_19 = arith.constant 0 : index
    %c0_20 = arith.constant 0 : index
    %26 = vector.load %arg10[%c0_19, %c0_20] : memref<128x256xf32, #tpu.memory_space<vmem>>, vector<128x256xf32>
    %c0_21 = arith.constant 0 : index
    %c0_22 = arith.constant 0 : index
    %27 = vector.load %arg7[%c0_21, %c0_22] : memref<128x256xf32, #tpu.memory_space<vmem>>, vector<128x256xf32>
    %cst_23 = arith.constant dense<0.000000e+00> : vector<128x256xf32>
    %28 = tpu.matmul %25, %27, %cst_23 {dimension_numbers = #tpu.dot_dimension_numbers<[1], [0], [0], [1], [0, 0, 1, 1], [], []>} : vector<128x128xf32>, vector<128x256xf32>, vector<128x256xf32> -> vector<128x256xf32>
    %29 = arith.addf %26, %28 : vector<128x256xf32>
    %c0_24 = arith.constant 0 : index
    %c0_25 = arith.constant 0 : index
    %30 = vector.load %arg10[%c0_24, %c0_25] : memref<128x256xf32, #tpu.memory_space<vmem>>, vector<128x256xf32>
    tpu.vector_store %arg10[%c0_24, %c0_25], %29 {strides = array<i32>} : memref<128x256xf32, #tpu.memory_space<vmem>>, vector<128x256xf32>,
    %c1_i32 = arith.constant 1 : i32
    %31 = arith.cmpi eq, %arg1, %c1_i32 : i32
    %32 = arith.extui %31 : i1 to i32
    %c0_i32_26 = arith.constant 0 : i32
    %33 = arith.cmpi ne, %32, %c0_i32_26 : i32
    scf.if %33 {
      %c0_27 = arith.constant 0 : index
      %c0_28 = arith.constant 0 : index
      %34 = vector.load %arg10[%c0_27, %c0_28] : memref<128x256xf32, #tpu.memory_space<vmem>>, vector<128x256xf32>
      %c0_29 = arith.constant 0 : index
      %c0_30 = arith.constant 0 : index
      %35 = vector.load %arg8[%c0_29, %c0_30] : memref<1x256xf32, #tpu.memory_space<vmem>>, vector<1x256xf32>
      %36 = vector.broadcast %35 : vector<1x256xf32> to vector<128x256xf32>
      %37 = arith.addf %34, %36 : vector<128x256xf32>
      %c0_31 = arith.constant 0 : index
      %c0_32 = arith.constant 0 : index
      %c0_33 = arith.constant 0 : index
      %38 = vector.load %arg9[%c0_31, %c0_32, %c0_33] : memref<1x128x256xf32, #tpu.memory_space<vmem>>, vector<1x128x256xf32>
      %39 = vector.shape_cast %38 : vector<1x128x256xf32> to vector<128x256xf32>
      %40 = vector.shape_cast %37 : vector<128x256xf32> to vector<1x128x256xf32>
      tpu.vector_store %arg9[%c0_31, %c0_32, %c0_33], %40 {strides = array<i32>} : memref<1x128x256xf32, #tpu.memory_space<vmem>>, vector<1x128x256xf32>,
    } else {
    }
    return
  }
  func.func @transform_0(%arg0: i32, %arg1: i32) -> (i32, i32, i32) {
    %c0_i32 = arith.constant 0 : i32
    %c0_i32_0 = arith.constant 0 : i32
    %c0_i32_1 = arith.constant 0 : i32
    return %arg0, %c0_i32, %c0_i32_0 : i32, i32, i32
  }
  func.func @transform_1(%arg0: i32, %arg1: i32) -> (i32, i32, i32) {
    %c0_i32 = arith.constant 0 : i32
    %c0_i32_0 = arith.constant 0 : i32
    %c0_i32_1 = arith.constant 0 : i32
    return %arg0, %c0_i32, %c0_i32_0 : i32, i32, i32
  }
  func.func @transform_2(%arg0: i32, %arg1: i32) -> (i32, i32) {
    %c0_i32 = arith.constant 0 : i32
    %c0_i32_0 = arith.constant 0 : i32
    return %c0_i32, %arg1 : i32, i32
  }
  func.func @transform_3(%arg0: i32, %arg1: i32) -> (i32, i32) {
    %c0_i32 = arith.constant 0 : i32
    %c0_i32_0 = arith.constant 0 : i32
    return %c0_i32, %arg1 : i32, i32
  }
  func.func @transform_4(%arg0: i32, %arg1: i32) -> (i32, i32) {
    %c0_i32 = arith.constant 0 : i32
    %c0_i32_0 = arith.constant 0 : i32
    return %c0_i32, %arg1 : i32, i32
  }
  func.func @transform_5(%arg0: i32, %arg1: i32) -> (i32, i32) {
    %c0_i32 = arith.constant 0 : i32
    %c0_i32_0 = arith.constant 0 : i32
    return %arg1, %c0_i32 : i32, i32
  }
  func.func @transform_6(%arg0: i32, %arg1: i32) -> (i32, i32) {
    %c0_i32 = arith.constant 0 : i32
    %c0_i32_0 = arith.constant 0 : i32
    %c0_i32_1 = arith.constant 0 : i32
    return %c0_i32, %c0_i32_0 : i32, i32
  }
  func.func @transform_7(%arg0: i32, %arg1: i32) -> (i32, i32, i32) {
    %c0_i32 = arith.constant 0 : i32
    %c0_i32_0 = arith.constant 0 : i32
    %c0_i32_1 = arith.constant 0 : i32
    return %arg0, %c0_i32, %c0_i32_0 : i32, i32, i32
  }
}

</mosaic_0001>

<llo_original>
// kernel: tpu_custom_call.1
$region0: #{tpu_custom_call.1}
  #allocation0 [shape = 'u32[]', space=smem, size = 0x4, offset = 0x4, fixed_abs, tag = 'smem constant byte address 0x4 - core index']
  #allocation1 [shape = 'u32[72,128]{1,0:T(1,128)}', space=vmem, size = 0x9000, scoped, tag = 'internal scratch']
  #allocation2 [shape = 'f32[128,256]{1,0:T(8,128)}', space=vmem, size = 0x20000, scoped, tag = 'scratch operand']
  %s0 = inlined_call_operand.hbm [shape: f32[2,128,256], index: 0, kind: input, shape index: {}]
  %s1 = inlined_call_operand.hbm [shape: f32[2,128,256], index: 1, kind: input, shape index: {}]
  %s2 = inlined_call_operand.hbm [shape: f32[256,256], index: 2, kind: input, shape index: {}]
  %s3 = inlined_call_operand.hbm [shape: f32[256,256], index: 3, kind: input, shape index: {}]
  %s4 = inlined_call_operand.hbm [shape: f32[256,256], index: 4, kind: input, shape index: {}]
  %s5 = inlined_call_operand.hbm [shape: f32[256,256], index: 5, kind: input, shape index: {}]
  %s6 = inlined_call_operand.vmem [shape: f32[1,256], index: 6, kind: input, shape index: {}]
  %s7 = inlined_call_operand.hbm [shape: f32[2,128,256], index: 7, kind: output, shape index: {}]
  %s8 = sld [smem:[#allocation0]]
  $region93: #{tpu_custom_call.1} parent=0
    _
  %s10 = ssub.s32 1, %s8
  %s11 = scalar_select 0, %s10, %s8
  $region1: #{tpu_custom_call.1} parent=0
    #allocation3 [shape = 'u8[262144]{0}', space=vmem, size = 0x40000, scoped, tag = 'input window, operand 0']
    #allocation4 [shape = 's32[2]{0}', space=sflag, size = 0x8, scoped, tag = 'scoped memory for tpu_custom_call.1']
    #allocation5 [shape = 's32[2]{0}', space=sflag, size = 0x8, scoped, tag = 'scoped memory for tpu_custom_call.1']
    #allocation6 [shape = 'u8[262144]{0}', space=vmem, size = 0x40000, scoped, tag = 'input window, operand 1']
    #allocation7 [shape = 's32[2]{0}', space=sflag, size = 0x8, scoped, tag = 'scoped memory for tpu_custom_call.1']
    #allocation8 [shape = 'u8[262144]{0}', space=vmem, size = 0x40000, scoped, tag = 'input window, operand 2']
    #allocation9 [shape = 'u8[262144]{0}', space=vmem, size = 0x40000, scoped, tag = 'input window, operand 3']
    #allocation10 [shape = 's32[2]{0}', space=sflag, size = 0x8, scoped, tag = 'scoped memory for tpu_custom_call.1']
    #allocation11 [shape = 'u8[262144]{0}', space=vmem, size = 0x40000, scoped, tag = 'input window, operand 4']
    #allocation12 [shape = 'u8[262144]{0}', space=vmem, size = 0x40000, scoped, tag = 'input window, operand 5']
    #allocation13 [shape = 's32[2]{0}', space=sflag, size = 0x8, scoped, tag = 'scoped memory for tpu_custom_call.1']
    #allocation14 [shape = 'u8[262144]{0}', space=vmem, size = 0x40000, scoped, tag = 'output window, operand 0']
    %12 = vsyncpa [#allocation4], 0
    %s13 = scalar_lea.sflag [#allocation4], 1
    %14 = vsyncpa %s13, 0
    %15 = vsyncpa [#allocation7], 0
    %s16 = scalar_lea.sflag [#allocation7], 1
    %17 = vsyncpa %s16, 0
    %18 = vsyncpa [#allocation10], 0
    %s19 = scalar_lea.sflag [#allocation10], 1
    %20 = vsyncpa %s19, 0
    %21 = vsyncpa [#allocation13], 0
    %s22 = scalar_lea.sflag [#allocation13], 1
    %23 = vsyncpa %s22, 0
    %24 = vsyncpa [#allocation5], 0
    %s25 = scalar_lea.sflag [#allocation5], 1
    %26 = vsyncpa %s25, 0
    loop: start=0, step=1, limit=6
    $region2: #{tpu_custom_call.1} parent=1 // loop_pre_header
      _
    $region3: #{tpu_custom_call.1} parent=1 // loop_header
      %s28 = sphi 0, %s32
      %p29 = scmp.ge.s32.totalorder %s28, 6
      %s35 = sphi 0, %s47
      %s36 = sphi 0, %s43
      %s37 = sphi 0, %s35
      %s38 = sphi 0, %s36
      %s39 = sphi 0, %s37
      %s40 = sphi 0, %s38
      %s50 = sphi 0, %s52
      %s53 = sphi 0, %s50
      %s54 = sphi 0, %s53
      %s70 = sphi 0, %s54
      %s76 = sphi 0, %s78
      %s79 = sphi 0, %s76
      %s80 = sphi 0, %s79
      %s96 = sphi 0, %s80
      %s102 = sphi 0, %s104
      %s105 = sphi 0, %s102
      %s106 = sphi 0, %s105
      %s122 = sphi 0, %s106
      %s128 = sphi 0, %s130
      %s131 = sphi 0, %s128
      %s132 = sphi 0, %s131
      %s148 = sphi 0, %s132
      %s154 = sphi 0, %s156
      %s157 = sphi 0, %s154
      %s158 = sphi 0, %s157
      %s174 = sphi 0, %s158
      %s180 = sphi 0, %s182
      %s183 = sphi 0, %s180
      %s184 = sphi 0, %s183
      %s200 = sphi 0, %s184
      %s204 = sphi 0, %s204
      %s206 = sphi 0, %s204
      %s207 = sphi 0, %s206
      %s221 = sphi 0, %s207
      %s227 = sphi 0, %s229
      %s230 = sphi 0, %s227
      %s231 = sphi 0, %s230
      %s247 = sphi 0, %s231
    $region4: #{tpu_custom_call.1} parent=1 // loop_header_branch
      %31 = sbr.rel (%p29) target = $region8
    $region5: #{tpu_custom_call.1} parent=1 // loop_body
      %s33 = ssub.s32 %s28, 1
      %s34 = ssub.s32 %s28, 2
      %s41 = sadd.s32 1, %s36
      %p42 = scmp.ge.s32.totalorder %s41, 2
      %s43 = scalar_select %p42, 0, %s41
      %s44 = sadd.s32 1, %s35
      %s45 = scalar_select %p42, %s44, %s35
      %p46 = scmp.ge.s32.totalorder %s45, 2
      %s47 = scalar_select %p46, 0, %s45
      %s48 = ssub.s32 %s35, %s47
      %p49 = scmp.eq.s32.totalorder %s48, 0
      %s51 = sadd.s32 %s50, 1
      %s52 = scalar_select %p49, %s50, %s51
      %p55 = pneg %p49
      %p56 = scmp.eq.s32.totalorder %s28, 3
      %p57 = por %p55, %p56
      %p58 = scmp.ne.s32.totalorder %s50, %s53
      %p59 = scmp.eq.s32.totalorder %s28, 0
      %p60 = por %p58, %p59
      %p61 = scmp.ne.s32.totalorder %s50, %s53
      %p62 = scmp.eq.s32.totalorder %s33, 3
      %p63 = por %p61, %p62
      %p64 = scmp.ne.s32.totalorder %s53, %s54
      %p65 = scmp.eq.s32.totalorder %s33, 0
      %p66 = por %p64, %p65
      %p67 = scmp.ne.s32.totalorder %s53, %s54
      %p68 = scmp.eq.s32.totalorder %s34, 3
      %p69 = por %p67, %p68
      %p71 = scmp.ne.s32.totalorder %s54, %s70
      %p72 = scmp.eq.s32.totalorder %s34, 0
      %p73 = por %p71, %p72
      %s74 = ssub.s32 %s35, %s47
      %p75 = scmp.eq.s32.totalorder %s74, 0
      %s77 = sadd.s32 %s76, 1
      %s78 = scalar_select %p75, %s76, %s77
      %p81 = pneg %p75
      %p82 = scmp.eq.s32.totalorder %s28, 3
      %p83 = por %p81, %p82
      %p84 = scmp.ne.s32.totalorder %s76, %s79
      %p85 = scmp.eq.s32.totalorder %s28, 0
      %p86 = por %p84, %p85
      %p87 = scmp.ne.s32.totalorder %s76, %s79
      %p88 = scmp.eq.s32.totalorder %s33, 3
      %p89 = por %p87, %p88
      %p90 = scmp.ne.s32.totalorder %s79, %s80
      %p91 = scmp.eq.s32.totalorder %s33, 0
      %p92 = por %p90, %p91
      %p93 = scmp.ne.s32.totalorder %s79, %s80
      %p94 = scmp.eq.s32.totalorder %s34, 3
      %p95 = por %p93, %p94
      %p97 = scmp.ne.s32.totalorder %s80, %s96
      %p98 = scmp.eq.s32.totalorder %s34, 0
      %p99 = por %p97, %p98
      %s100 = ssub.s32 %s36, %s43
      %p101 = scmp.eq.s32.totalorder %s100, 0
      %s103 = sadd.s32 %s102, 1
      %s104 = scalar_select %p101, %s102, %s103
      %p107 = pneg %p101
      %p108 = scmp.eq.s32.totalorder %s28, 3
      %p109 = por %p107, %p108
      %p110 = scmp.ne.s32.totalorder %s102, %s105
      %p111 = scmp.eq.s32.totalorder %s28, 0
      %p112 = por %p110, %p111
      %p113 = scmp.ne.s32.totalorder %s102, %s105
      %p114 = scmp.eq.s32.totalorder %s33, 3
      %p115 = por %p113, %p114
      %p116 = scmp.ne.s32.totalorder %s105, %s106
      %p117 = scmp.eq.s32.totalorder %s33, 0
      %p118 = por %p116, %p117
      %p119 = scmp.ne.s32.totalorder %s105, %s106
      %p120 = scmp.eq.s32.totalorder %s34, 3
      %p121 = por %p119, %p120
      %p123 = scmp.ne.s32.totalorder %s106, %s122
      %p124 = scmp.eq.s32.totalorder %s34, 0
      %p125 = por %p123, %p124
      %s126 = ssub.s32 %s36, %s43
      %p127 = scmp.eq.s32.totalorder %s126, 0
      %s129 = sadd.s32 %s128, 1
      %s130 = scalar_select %p127, %s128, %s129
      %p133 = pneg %p127
      %p134 = scmp.eq.s32.totalorder %s28, 3
      %p135 = por %p133, %p134
      %p136 = scmp.ne.s32.totalorder %s128, %s131
      %p137 = scmp.eq.s32.totalorder %s28, 0
      %p138 = por %p136, %p137
      %p139 = scmp.ne.s32.totalorder %s128, %s131
      %p140 = scmp.eq.s32.totalorder %s33, 3
      %p141 = por %p139, %p140
      %p142 = scmp.ne.s32.totalorder %s131, %s132
      %p143 = scmp.eq.s32.totalorder %s33, 0
      %p144 = por %p142, %p143
      %p145 = scmp.ne.s32.totalorder %s131, %s132
      %p146 = scmp.eq.s32.totalorder %s34, 3
      %p147 = por %p145, %p146
      %p149 = scmp.ne.s32.totalorder %s132, %s148
      %p150 = scmp.eq.s32.totalorder %s34, 0
      %p151 = por %p149, %p150
      %s152 = ssub.s32 %s36, %s43
      %p153 = scmp.eq.s32.totalorder %s152, 0
      %s155 = sadd.s32 %s154, 1
      %s156 = scalar_select %p153, %s154, %s155
      %p159 = pneg %p153
      %p160 = scmp.eq.s32.totalorder %s28, 3
      %p161 = por %p159, %p160
      %p162 = scmp.ne.s32.totalorder %s154, %s157
      %p163 = scmp.eq.s32.totalorder %s28, 0
      %p164 = por %p162, %p163
      %p165 = scmp.ne.s32.totalorder %s154, %s157
      %p166 = scmp.eq.s32.totalorder %s33, 3
      %p167 = por %p165, %p166
      %p168 = scmp.ne.s32.totalorder %s157, %s158
      %p169 = scmp.eq.s32.totalorder %s33, 0
      %p170 = por %p168, %p169
      %p171 = scmp.ne.s32.totalorder %s157, %s158
      %p172 = scmp.eq.s32.totalorder %s34, 3
      %p173 = por %p171, %p172
      %p175 = scmp.ne.s32.totalorder %s158, %s174
      %p176 = scmp.eq.s32.totalorder %s34, 0
      %p177 = por %p175, %p176
      %s178 = ssub.s32 %s36, %s43
      %p179 = scmp.eq.s32.totalorder %s178, 0
      %s181 = sadd.s32 %s180, 1
      %s182 = scalar_select %p179, %s180, %s181
      %p185 = pneg %p179
      %p186 = scmp.eq.s32.totalorder %s28, 3
      %p187 = por %p185, %p186
      %p188 = scmp.ne.s32.totalorder %s180, %s183
      %p189 = scmp.eq.s32.totalorder %s28, 0
      %p190 = por %p188, %p189
      %p191 = scmp.ne.s32.totalorder %s180, %s183
      %p192 = scmp.eq.s32.totalorder %s33, 3
      %p193 = por %p191, %p192
      %p194 = scmp.ne.s32.totalorder %s183, %s184
      %p195 = scmp.eq.s32.totalorder %s33, 0
      %p196 = por %p194, %p195
      %p197 = scmp.ne.s32.totalorder %s183, %s184
      %p198 = scmp.eq.s32.totalorder %s34, 3
      %p199 = por %p197, %p198
      %p201 = scmp.ne.s32.totalorder %s184, %s200
      %p202 = scmp.eq.s32.totalorder %s34, 0
      %p203 = por %p201, %p202
      %s205 = sadd.s32 %s204, 1
      %p208 = scmp.eq.s32.totalorder %s28, 3
      %p209 = scmp.ne.s32.totalorder %s204, %s206
      %p210 = scmp.eq.s32.totalorder %s28, 0
      %p211 = por %p209, %p210
      %p212 = scmp.ne.s32.totalorder %s204, %s206
      %p213 = scmp.eq.s32.totalorder %s33, 3
      %p214 = por %p212, %p213
      %p215 = scmp.ne.s32.totalorder %s206, %s207
      %p216 = scmp.eq.s32.totalorder %s33, 0
      %p217 = por %p215, %p216
      %p218 = scmp.ne.s32.totalorder %s206, %s207
      %p219 = scmp.eq.s32.totalorder %s34, 3
      %p220 = por %p218, %p219
      %p222 = scmp.ne.s32.totalorder %s207, %s221
      %p223 = scmp.eq.s32.totalorder %s34, 0
      %p224 = por %p222, %p223
      %s225 = ssub.s32 %s35, %s47
      %p226 = scmp.eq.s32.totalorder %s225, 0
      %s228 = sadd.s32 %s227, 1
      %s229 = scalar_select %p226, %s227, %s228
      %p232 = pneg %p226
      %p233 = scmp.eq.s32.totalorder %s28, 3
      %p234 = por %p232, %p233
      %p235 = scmp.ne.s32.totalorder %s227, %s230
      %p236 = scmp.eq.s32.totalorder %s28, 0
      %p237 = por %p235, %p236
      %p238 = scmp.ne.s32.totalorder %s227, %s230
      %p239 = scmp.eq.s32.totalorder %s33, 3
      %p240 = por %p238, %p239
      %p241 = scmp.ne.s32.totalorder %s230, %s231
      %p242 = scmp.eq.s32.totalorder %s33, 0
      %p243 = por %p241, %p242
      %p244 = scmp.ne.s32.totalorder %s230, %s231
      %p245 = scmp.eq.s32.totalorder %s34, 3
      %p246 = por %p244, %p245
      %p248 = scmp.ne.s32.totalorder %s231, %s247
      %p249 = scmp.eq.s32.totalorder %s34, 0
      %p250 = por %p248, %p249
      %p251 = scmp.le.s32.totalorder 1, %s28
      %p252 = scmp.lt.s32.totalorder %s28, 5
      %p253 = pnand %p251, %p252
      %p254 = pneg %p253
      // Predicated region
      $region9: #{tpu_custom_call.1} parent=5 // pred_check
        _
      $region10: #{tpu_custom_call.1} parent=5 // pred_check_branch
        %256 = sbr.rel (%p253) target = $region12
      $region11: #{tpu_custom_call.1} parent=5 // pred_region
        %s257 = ssub.s32 %s28, 1
        // Predicated region
        $region13: #{tpu_custom_call.1} parent=11 // pred_check
          %p258 = pneg %p217
        $region14: #{tpu_custom_call.1} parent=11 // pred_check_branch
          %260 = sbr.rel (%p258) target = $region16
        $region15: #{tpu_custom_call.1} parent=11 // pred_region
          _
        $region16: #{tpu_custom_call.1} parent=11 // pred_fallthru
          _
      $region12: #{tpu_custom_call.1} parent=5 // pred_fallthru
        _
      %p261 = scmp.lt.s32.totalorder %s28, 4
      // Predicated region
      $region17: #{tpu_custom_call.1} parent=5 // pred_check
        %p262 = pneg %p261
      $region18: #{tpu_custom_call.1} parent=5 // pred_check_branch
        %264 = sbr.rel (%p262) target = $region20
      $region19: #{tpu_custom_call.1} parent=5 // pred_region
        // Predicated region
        $region21: #{tpu_custom_call.1} parent=19 // pred_check
          %p265 = pneg %p60
        $region22: #{tpu_custom_call.1} parent=19 // pred_check_branch
          %267 = sbr.rel (%p265) target = $region24
        $region23: #{tpu_custom_call.1} parent=19 // pred_region
          %s268 = sand.u32 %s50, 1
          %s269 = scalar_lea.sflag [#allocation4], %s268
          %s270 = sand.u32 %s50, 1
          %s271 = smul.addr %s270, 256
          %s272 = scalar_lea.vmem [#allocation3], %s271
          %274 = vsyncadd %s269, 0
          %s275 = smul.addr %s35, 32
          %s276 = smul.addr %s275, 8
          %s277 = scalar_lea.hbm %s0, %s276
          %s278 = sshll.u32 %s277, 4
          %s279 = int_to_ptr.hbm [resolvable:$true] %s278
          %s280 = sshll.u32 %s272, 4
          %s281 = int_to_ptr.vmem [resolvable:$true] %s280
          %286 = dma.hbm_to_vmem [thread:$0]  %s279, 4096, %s281, %s269, 256, 256, 16
        $region24: #{tpu_custom_call.1} parent=19 // pred_fallthru
          _
        // Predicated region
        $region25: #{tpu_custom_call.1} parent=19 // pred_check
          %p287 = pneg %p86
        $region26: #{tpu_custom_call.1} parent=19 // pred_check_branch
          %289 = sbr.rel (%p287) target = $region28
        $region27: #{tpu_custom_call.1} parent=19 // pred_region
          %s290 = sand.u32 %s28, 1
          %s291 = scalar_lea.sflag [#allocation7], %s290
          %s292 = sand.u32 %s76, 1
          %s293 = smul.addr %s292, 256
          %s294 = scalar_lea.vmem [#allocation6], %s293
          %296 = vsyncadd %s291, 0
          %s297 = smul.addr %s35, 32
          %s298 = smul.addr %s297, 8
          %s299 = scalar_lea.hbm %s1, %s298
          %s300 = sshll.u32 %s299, 4
          %s301 = int_to_ptr.hbm [resolvable:$true] %s300
          %s302 = sshll.u32 %s294, 4
          %s303 = int_to_ptr.vmem [resolvable:$true] %s302
          %308 = dma.hbm_to_vmem [thread:$0]  %s301, 4096, %s303, %s291, 256, 256, 16
        $region28: #{tpu_custom_call.1} parent=19 // pred_fallthru
          _
        // Predicated region
        $region29: #{tpu_custom_call.1} parent=19 // pred_check
          %p309 = pneg %p112
        $region30: #{tpu_custom_call.1} parent=19 // pred_check_branch
          %311 = sbr.rel (%p309) target = $region32
        $region31: #{tpu_custom_call.1} parent=19 // pred_region
          %s312 = sand.u32 %s28, 1
          %s313 = scalar_lea.sflag [#allocation7], %s312
          %s314 = sand.u32 %s102, 1
          %s315 = smul.addr %s314, 256
          %s316 = scalar_lea.vmem [#allocation8], %s315
          %318 = vsyncadd %s313, 0
          %s319 = smul.addr %s36, 8
          %s320 = scalar_lea.hbm %s2, %s319
          %s321 = sshll.u32 %s320, 4
          %s322 = int_to_ptr.hbm [resolvable:$true] %s321
          %s323 = sshll.u32 %s316, 4
          %s324 = int_to_ptr.vmem [resolvable:$true] %s323
          %329 = dma.hbm_to_vmem [thread:$0]  %s322, 4096, %s324, %s313, 256, 128, 8
        $region32: #{tpu_custom_call.1} parent=19 // pred_fallthru
          _
        // Predicated region
        $region33: #{tpu_custom_call.1} parent=19 // pred_check
          %p330 = pneg %p138
        $region34: #{tpu_custom_call.1} parent=19 // pred_check_branch
          %332 = sbr.rel (%p330) target = $region36
        $region35: #{tpu_custom_call.1} parent=19 // pred_region
          %s333 = sand.u32 %s28, 1
          %s334 = scalar_lea.sflag [#allocation10], %s333
          %s335 = sand.u32 %s128, 1
          %s336 = smul.addr %s335, 256
          %s337 = scalar_lea.vmem [#allocation9], %s336
          %339 = vsyncadd %s334, 0
          %s340 = smul.addr %s36, 8
          %s341 = scalar_lea.hbm %s3, %s340
          %s342 = sshll.u32 %s341, 4
          %s343 = int_to_ptr.hbm [resolvable:$true] %s342
          %s344 = sshll.u32 %s337, 4
          %s345 = int_to_ptr.vmem [resolvable:$true] %s344
          %350 = dma.hbm_to_vmem [thread:$0]  %s343, 4096, %s345, %s334, 256, 128, 8
        $region36: #{tpu_custom_call.1} parent=19 // pred_fallthru
          _
        // Predicated region
        $region37: #{tpu_custom_call.1} parent=19 // pred_check
          %p351 = pneg %p164
        $region38: #{tpu_custom_call.1} parent=19 // pred_check_branch
          %353 = sbr.rel (%p351) target = $region40
        $region39: #{tpu_custom_call.1} parent=19 // pred_region
          %s354 = sand.u32 %s28, 1
          %s355 = scalar_lea.sflag [#allocation10], %s354
          %s356 = sand.u32 %s154, 1
          %s357 = smul.addr %s356, 256
          %s358 = scalar_lea.vmem [#allocation11], %s357
          %360 = vsyncadd %s355, 0
          %s361 = smul.addr %s36, 8
          %s362 = scalar_lea.hbm %s4, %s361
          %s363 = sshll.u32 %s362, 4
          %s364 = int_to_ptr.hbm [resolvable:$true] %s363
          %s365 = sshll.u32 %s358, 4
          %s366 = int_to_ptr.vmem [resolvable:$true] %s365
          %371 = dma.hbm_to_vmem [thread:$0]  %s364, 4096, %s366, %s355, 256, 128, 8
        $region40: #{tpu_custom_call.1} parent=19 // pred_fallthru
          _
        // Predicated region
        $region41: #{tpu_custom_call.1} parent=19 // pred_check
          %p372 = pneg %p190
        $region42: #{tpu_custom_call.1} parent=19 // pred_check_branch
          %374 = sbr.rel (%p372) target = $region44
        $region43: #{tpu_custom_call.1} parent=19 // pred_region
          %s375 = sand.u32 %s180, 1
          %s376 = scalar_lea.sflag [#allocation13], %s375
          %s377 = sand.u32 %s180, 1
          %s378 = smul.addr %s377, 256
          %s379 = scalar_lea.vmem [#allocation12], %s378
          %s380 = smul.u32 16, %s36
          %382 = vsyncadd %s376, 0
          %s383 = smul.addr %s380, 2
          %s384 = smul.addr %s383, 8
          %s385 = scalar_lea.hbm %s5, %s384
          %s386 = sshll.u32 %s385, 4
          %s387 = int_to_ptr.hbm [resolvable:$true] %s386
          %s388 = sshll.u32 %s379, 4
          %s389 = int_to_ptr.vmem [resolvable:$true] %s388
          %394 = dma.hbm_to_vmem [thread:$0]  %s387, 4096, %s389, %s376, 256, 256, 16
        $region44: #{tpu_custom_call.1} parent=19 // pred_fallthru
          _
      $region20: #{tpu_custom_call.1} parent=5 // pred_fallthru
        _
      %p395 = scmp.le.s32.totalorder 1, %s28
      %p396 = scmp.lt.s32.totalorder %s28, 5
      %p397 = pnand %p395, %p396
      %p398 = pneg %p397
      // Predicated region
      $region45: #{tpu_custom_call.1} parent=5 // pred_check
        _
      $region46: #{tpu_custom_call.1} parent=5 // pred_check_branch
        %400 = sbr.rel (%p397) target = $region48
      $region47: #{tpu_custom_call.1} parent=5 // pred_region
        %s401 = ssub.s32 %s28, 1
        %s402 = sand.u32 %s53, 1
        %s403 = scalar_lea.sflag [#allocation4], %s402
        %s404 = sand.u32 %s53, 1
        %s405 = smul.addr %s404, 256
        %s406 = scalar_lea.vmem [#allocation3], %s405
        // Predicated region
        $region49: #{tpu_custom_call.1} parent=47 // pred_check
          %p407 = pneg %p66
        $region50: #{tpu_custom_call.1} parent=47 // pred_check_branch
          %409 = sbr.rel (%p407) target = $region52
        $region51: #{tpu_custom_call.1} parent=47 // pred_region
          %411 = dma.done %s403, 4096
        $region52: #{tpu_custom_call.1} parent=47 // pred_fallthru
          _
        %s412 = sand.u32 %s33, 1
        %s413 = scalar_lea.sflag [#allocation7], %s412
        %s414 = sand.u32 %s79, 1
        %s415 = smul.addr %s414, 256
        %s416 = scalar_lea.vmem [#allocation6], %s415
        // Predicated region
        $region53: #{tpu_custom_call.1} parent=47 // pred_check
          %p417 = pneg %p92
        $region54: #{tpu_custom_call.1} parent=47 // pred_check_branch
          %419 = sbr.rel (%p417) target = $region56
        $region55: #{tpu_custom_call.1} parent=47 // pred_region
          %421 = dma.done %s413, 4096
        $region56: #{tpu_custom_call.1} parent=47 // pred_fallthru
          _
        %s422 = sand.u32 %s33, 1
        %s423 = scalar_lea.sflag [#allocation7], %s422
        %s424 = sand.u32 %s105, 1
        %s425 = smul.addr %s424, 256
        %s426 = scalar_lea.vmem [#allocation8], %s425
        // Predicated region
        $region57: #{tpu_custom_call.1} parent=47 // pred_check
          %p427 = pneg %p118
        $region58: #{tpu_custom_call.1} parent=47 // pred_check_branch
          %429 = sbr.rel (%p427) target = $region60
        $region59: #{tpu_custom_call.1} parent=47 // pred_region
          %431 = dma.done %s423, 4096
        $region60: #{tpu_custom_call.1} parent=47 // pred_fallthru
          _
        %s432 = sand.u32 %s33, 1
        %s433 = scalar_lea.sflag [#allocation10], %s432
        %s434 = sand.u32 %s131, 1
        %s435 = smul.addr %s434, 256
        %s436 = scalar_lea.vmem [#allocation9], %s435
        // Predicated region
        $region61: #{tpu_custom_call.1} parent=47 // pred_check
          %p437 = pneg %p144
        $region62: #{tpu_custom_call.1} parent=47 // pred_check_branch
          %439 = sbr.rel (%p437) target = $region64
        $region63: #{tpu_custom_call.1} parent=47 // pred_region
          %441 = dma.done %s433, 4096
        $region64: #{tpu_custom_call.1} parent=47 // pred_fallthru
          _
        %s442 = sand.u32 %s33, 1
        %s443 = scalar_lea.sflag [#allocation10], %s442
        %s444 = sand.u32 %s157, 1
        %s445 = smul.addr %s444, 256
        %s446 = scalar_lea.vmem [#allocation11], %s445
        // Predicated region
        $region65: #{tpu_custom_call.1} parent=47 // pred_check
          %p447 = pneg %p170
        $region66: #{tpu_custom_call.1} parent=47 // pred_check_branch
          %449 = sbr.rel (%p447) target = $region68
        $region67: #{tpu_custom_call.1} parent=47 // pred_region
          %451 = dma.done %s443, 4096
        $region68: #{tpu_custom_call.1} parent=47 // pred_fallthru
          _
        %s452 = sand.u32 %s183, 1
        %s453 = scalar_lea.sflag [#allocation13], %s452
        %s454 = sand.u32 %s183, 1
        %s455 = smul.addr %s454, 256
        %s456 = scalar_lea.vmem [#allocation12], %s455
        // Predicated region
        $region69: #{tpu_custom_call.1} parent=47 // pred_check
          %p457 = pneg %p196
        $region70: #{tpu_custom_call.1} parent=47 // pred_check_branch
          %459 = sbr.rel (%p457) target = $region72
        $region71: #{tpu_custom_call.1} parent=47 // pred_region
          %461 = dma.done %s453, 4096
        $region72: #{tpu_custom_call.1} parent=47 // pred_fallthru
          _
        %s462 = sand.u32 %s53, 1
        %s463 = scalar_lea.sflag [#allocation4], %s462
        %s464 = sand.u32 %s53, 1
        %s465 = smul.addr %s464, 256
        %s466 = scalar_lea.vmem [#allocation3], %s465
        %p467 = pneg %p66
        %p468 = pneg %p63
        %s469 = sand.u32 %s33, 1
        %s470 = scalar_lea.sflag [#allocation7], %s469
        %s471 = sand.u32 %s79, 1
        %s472 = smul.addr %s471, 256
        %s473 = scalar_lea.vmem [#allocation6], %s472
        %p474 = pneg %p92
        %p475 = pneg %p89
        %s476 = sand.u32 %s33, 1
        %s477 = scalar_lea.sflag [#allocation7], %s476
        %s478 = sand.u32 %s105, 1
        %s479 = smul.addr %s478, 256
        %s480 = scalar_lea.vmem [#allocation8], %s479
        %p481 = pneg %p118
        %p482 = pneg %p115
        %s483 = sand.u32 %s33, 1
        %s484 = scalar_lea.sflag [#allocation10], %s483
        %s485 = sand.u32 %s131, 1
        %s486 = smul.addr %s485, 256
        %s487 = scalar_lea.vmem [#allocation9], %s486
        %p488 = pneg %p144
        %p489 = pneg %p141
        %s490 = sand.u32 %s33, 1
        %s491 = scalar_lea.sflag [#allocation10], %s490
        %s492 = sand.u32 %s157, 1
        %s493 = smul.addr %s492, 256
        %s494 = scalar_lea.vmem [#allocation11], %s493
        %p495 = pneg %p170
        %p496 = pneg %p167
        %s497 = sand.u32 %s183, 1
        %s498 = scalar_lea.sflag [#allocation13], %s497
        %s499 = sand.u32 %s183, 1
        %s500 = smul.addr %s499, 256
        %s501 = scalar_lea.vmem [#allocation12], %s500
        %p502 = pneg %p196
        %p503 = pneg %p193
        %p504 = pneg %p217
        %p505 = pneg %p214
        %p506 = pneg %p243
        %p507 = pneg %p240
        %s508 = sand.u32 %s230, 1
        %s509 = scalar_lea.sflag [#allocation5], %s508
        %s510 = sand.u32 %s230, 1
        %s511 = smul.addr %s510, 256
        %s512 = scalar_lea.vmem [#allocation14], %s511
        %s513 = smul.u32 16, %s38
        %p514 = scmp.eq.s32.totalorder %s38, 0
        // Predicated region
        $region73: #{tpu_custom_call.1} parent=47 // pred_check
          %p515 = pneg %p514
        $region74: #{tpu_custom_call.1} parent=47 // pred_check_branch
          %517 = sbr.rel (%p515) target = $region76
        $region75: #{tpu_custom_call.1} parent=47 // pred_region
          %518 = vst [vmem:[#allocation2] sm:$0xff] 0.0
          %519 = vst [vmem:[#allocation2 + $0x8] sm:$0xff] 0.0
          %520 = vst [vmem:[#allocation2 + $0x10] sm:$0xff] 0.0
          %521 = vst [vmem:[#allocation2 + $0x18] sm:$0xff] 0.0
          %522 = vst [vmem:[#allocation2 + $0x20] sm:$0xff] 0.0
          %523 = vst [vmem:[#allocation2 + $0x28] sm:$0xff] 0.0
          %524 = vst [vmem:[#allocation2 + $0x30] sm:$0xff] 0.0
          %525 = vst [vmem:[#allocation2 + $0x38] sm:$0xff] 0.0
          %526 = vst [vmem:[#allocation2 + $0x40] sm:$0xff] 0.0
          %527 = vst [vmem:[#allocation2 + $0x48] sm:$0xff] 0.0
          %528 = vst [vmem:[#allocation2 + $0x50] sm:$0xff] 0.0
          %529 = vst [vmem:[#allocation2 + $0x58] sm:$0xff] 0.0
          %530 = vst [vmem:[#allocation2 + $0x60] sm:$0xff] 0.0
          %531 = vst [vmem:[#allocation2 + $0x68] sm:$0xff] 0.0
          %532 = vst [vmem:[#allocation2 + $0x70] sm:$0xff] 0.0
          %533 = vst [vmem:[#allocation2 + $0x78] sm:$0xff] 0.0
          %534 = vst [vmem:[#allocation2 + $0x80] sm:$0xff] 0.0
          %535 = vst [vmem:[#allocation2 + $0x88] sm:$0xff] 0.0
          %536 = vst [vmem:[#allocation2 + $0x90] sm:$0xff] 0.0
          %537 = vst [vmem:[#allocation2 + $0x98] sm:$0xff] 0.0
          %538 = vst [vmem:[#allocation2 + $0xa0] sm:$0xff] 0.0
          %539 = vst [vmem:[#allocation2 + $0xa8] sm:$0xff] 0.0
          %540 = vst [vmem:[#allocation2 + $0xb0] sm:$0xff] 0.0
          %541 = vst [vmem:[#allocation2 + $0xb8] sm:$0xff] 0.0
          %542 = vst [vmem:[#allocation2 + $0xc0] sm:$0xff] 0.0
          %543 = vst [vmem:[#allocation2 + $0xc8] sm:$0xff] 0.0
          %544 = vst [vmem:[#allocation2 + $0xd0] sm:$0xff] 0.0
          %545 = vst [vmem:[#allocation2 + $0xd8] sm:$0xff] 0.0
          %546 = vst [vmem:[#allocation2 + $0xe0] sm:$0xff] 0.0
          %547 = vst [vmem:[#allocation2 + $0xe8] sm:$0xff] 0.0
          %548 = vst [vmem:[#allocation2 + $0xf0] sm:$0xff] 0.0
          %549 = vst [vmem:[#allocation2 + $0xf8] sm:$0xff] 0.0
        $region76: #{tpu_custom_call.1} parent=47 // pred_fallthru
          _
        %v550 = vld [vmem:[%s406] sm:$0xff]
        %v551 = vld [vmem:[%s406 + $0x8] sm:$0xff]
        %v552 = vld [vmem:[%s406 + $0x10] sm:$0xff]
        %v553 = vld [vmem:[%s406 + $0x18] sm:$0xff]
        %v554 = vld [vmem:[%s406 + $0x20] sm:$0xff]
        %v555 = vld [vmem:[%s406 + $0x28] sm:$0xff]
        %v556 = vld [vmem:[%s406 + $0x30] sm:$0xff]
        %v557 = vld [vmem:[%s406 + $0x38] sm:$0xff]
        %v558 = vld [vmem:[%s406 + $0x40] sm:$0xff]
        %v559 = vld [vmem:[%s406 + $0x48] sm:$0xff]
        %v560 = vld [vmem:[%s406 + $0x50] sm:$0xff]
        %v561 = vld [vmem:[%s406 + $0x58] sm:$0xff]
        %v562 = vld [vmem:[%s406 + $0x60] sm:$0xff]
        %v563 = vld [vmem:[%s406 + $0x68] sm:$0xff]
        %v564 = vld [vmem:[%s406 + $0x70] sm:$0xff]
        %v565 = vld [vmem:[%s406 + $0x78] sm:$0xff]
        %v566 = vld [vmem:[%s406 + $0x80] sm:$0xff]
        %v567 = vld [vmem:[%s406 + $0x88] sm:$0xff]
        %v568 = vld [vmem:[%s406 + $0x90] sm:$0xff]
        %v569 = vld [vmem:[%s406 + $0x98] sm:$0xff]
        %v570 = vld [vmem:[%s406 + $0xa0] sm:$0xff]
        %v571 = vld [vmem:[%s406 + $0xa8] sm:$0xff]
        %v572 = vld [vmem:[%s406 + $0xb0] sm:$0xff]
        %v573 = vld [vmem:[%s406 + $0xb8] sm:$0xff]
        %v574 = vld [vmem:[%s406 + $0xc0] sm:$0xff]
        %v575 = vld [vmem:[%s406 + $0xc8] sm:$0xff]
        %v576 = vld [vmem:[%s406 + $0xd0] sm:$0xff]
        %v577 = vld [vmem:[%s406 + $0xd8] sm:$0xff]
        %v578 = vld [vmem:[%s406 + $0xe0] sm:$0xff]
        %v579 = vld [vmem:[%s406 + $0xe8] sm:$0xff]
        %v580 = vld [vmem:[%s406 + $0xf0] sm:$0xff]
        %v581 = vld [vmem:[%s406 + $0xf8] sm:$0xff]
        %v582 = vld [vmem:[%s416] sm:$0xff]
        %v583 = vld [vmem:[%s416 + $0x8] sm:$0xff]
        %v584 = vld [vmem:[%s416 + $0x10] sm:$0xff]
        %v585 = vld [vmem:[%s416 + $0x18] sm:$0xff]
        %v586 = vld [vmem:[%s416 + $0x20] sm:$0xff]
        %v587 = vld [vmem:[%s416 + $0x28] sm:$0xff]
        %v588 = vld [vmem:[%s416 + $0x30] sm:$0xff]
        %v589 = vld [vmem:[%s416 + $0x38] sm:$0xff]
        %v590 = vld [vmem:[%s416 + $0x40] sm:$0xff]
        %v591 = vld [vmem:[%s416 + $0x48] sm:$0xff]
        %v592 = vld [vmem:[%s416 + $0x50] sm:$0xff]
        %v593 = vld [vmem:[%s416 + $0x58] sm:$0xff]
        %v594 = vld [vmem:[%s416 + $0x60] sm:$0xff]
        %v595 = vld [vmem:[%s416 + $0x68] sm:$0xff]
        %v596 = vld [vmem:[%s416 + $0x70] sm:$0xff]
        %v597 = vld [vmem:[%s416 + $0x78] sm:$0xff]
        %v598 = vld [vmem:[%s416 + $0x80] sm:$0xff]
        %v599 = vld [vmem:[%s416 + $0x88] sm:$0xff]
        %v600 = vld [vmem:[%s416 + $0x90] sm:$0xff]
        %v601 = vld [vmem:[%s416 + $0x98] sm:$0xff]
        %v602 = vld [vmem:[%s416 + $0xa0] sm:$0xff]
        %v603 = vld [vmem:[%s416 + $0xa8] sm:$0xff]
        %v604 = vld [vmem:[%s416 + $0xb0] sm:$0xff]
        %v605 = vld [vmem:[%s416 + $0xb8] sm:$0xff]
        %v606 = vld [vmem:[%s416 + $0xc0] sm:$0xff]
        %v607 = vld [vmem:[%s416 + $0xc8] sm:$0xff]
        %v608 = vld [vmem:[%s416 + $0xd0] sm:$0xff]
        %v609 = vld [vmem:[%s416 + $0xd8] sm:$0xff]
        %v610 = vld [vmem:[%s416 + $0xe0] sm:$0xff]
        %v611 = vld [vmem:[%s416 + $0xe8] sm:$0xff]
        %v612 = vld [vmem:[%s416 + $0xf0] sm:$0xff]
        %v613 = vld [vmem:[%s416 + $0xf8] sm:$0xff]
        %v614 = vld [vmem:[%s426] sm:$0xff]
        %v615 = vld [vmem:[%s426 + $0x8] sm:$0xff]
        %v616 = vld [vmem:[%s426 + $0x10] sm:$0xff]
        %v617 = vld [vmem:[%s426 + $0x18] sm:$0xff]
        %v618 = vld [vmem:[%s426 + $0x20] sm:$0xff]
        %v619 = vld [vmem:[%s426 + $0x28] sm:$0xff]
        %v620 = vld [vmem:[%s426 + $0x30] sm:$0xff]
        %v621 = vld [vmem:[%s426 + $0x38] sm:$0xff]
        %v622 = vld [vmem:[%s426 + $0x40] sm:$0xff]
        %v623 = vld [vmem:[%s426 + $0x48] sm:$0xff]
        %v624 = vld [vmem:[%s426 + $0x50] sm:$0xff]
        %v625 = vld [vmem:[%s426 + $0x58] sm:$0xff]
        %v626 = vld [vmem:[%s426 + $0x60] sm:$0xff]
        %v627 = vld [vmem:[%s426 + $0x68] sm:$0xff]
        %v628 = vld [vmem:[%s426 + $0x70] sm:$0xff]
        %v629 = vld [vmem:[%s426 + $0x78] sm:$0xff]
        %v630 = vld [vmem:[%s426 + $0x80] sm:$0xff]
        %v631 = vld [vmem:[%s426 + $0x88] sm:$0xff]
        %v632 = vld [vmem:[%s426 + $0x90] sm:$0xff]
        %v633 = vld [vmem:[%s426 + $0x98] sm:$0xff]
        %v634 = vld [vmem:[%s426 + $0xa0] sm:$0xff]
        %v635 = vld [vmem:[%s426 + $0xa8] sm:$0xff]
        %v636 = vld [vmem:[%s426 + $0xb0] sm:$0xff]
        %v637 = vld [vmem:[%s426 + $0xb8] sm:$0xff]
        %v638 = vld [vmem:[%s426 + $0xc0] sm:$0xff]
        %v639 = vld [vmem:[%s426 + $0xc8] sm:$0xff]
        %v640 = vld [vmem:[%s426 + $0xd0] sm:$0xff]
        %v641 = vld [vmem:[%s426 + $0xd8] sm:$0xff]
        %v642 = vld [vmem:[%s426 + $0xe0] sm:$0xff]
        %v643 = vld [vmem:[%s426 + $0xe8] sm:$0xff]
        %v644 = vld [vmem:[%s426 + $0xf0] sm:$0xff]
        %v645 = vld [vmem:[%s426 + $0xf8] sm:$0xff]
        %646 = vmatpush.msra.mxu0 %v629
        %647 = vmatpush.msra.mxu0 %v628
        %648 = vmatpush.msra.mxu0 %v627
        %649 = vmatpush.msra.mxu0 %v626
        %650 = vmatpush.msra.mxu0 %v625
        %651 = vmatpush.msra.mxu0 %v624
        %652 = vmatpush.msra.mxu0 %v623
        %653 = vmatpush.msra.mxu0 %v622
        %654 = vmatpush.msra.mxu0 %v621
        %655 = vmatpush.msra.mxu0 %v620
        %656 = vmatpush.msra.mxu0 %v619
        %657 = vmatpush.msra.mxu0 %v618
        %658 = vmatpush.msra.mxu0 %v617
        %659 = vmatpush.msra.mxu0 %v616
        %660 = vmatpush.msra.mxu0 %v615
        %661 = vmatpush.msra.mxu0 %v614
        %662 = vmatmul.f32.gmra.mxu0 %v550
        %v663 = vpop.f32.mrf.mxu0
        %v664 = vadd.f32 0.0, %v663
        %665 = vmatmul.f32.gmra.mxu0 %v552
        %v666 = vpop.f32.mrf.mxu0
        %v667 = vadd.f32 0.0, %v666
        %668 = vmatmul.f32.gmra.mxu0 %v554
        %v669 = vpop.f32.mrf.mxu0
        %v670 = vadd.f32 0.0, %v669
        %671 = vmatmul.f32.gmra.mxu0 %v556
        %v672 = vpop.f32.mrf.mxu0
        %v673 = vadd.f32 0.0, %v672
        %674 = vmatmul.f32.gmra.mxu0 %v558
        %v675 = vpop.f32.mrf.mxu0
        %v676 = vadd.f32 0.0, %v675
        %677 = vmatmul.f32.gmra.mxu0 %v560
        %v678 = vpop.f32.mrf.mxu0
        %v679 = vadd.f32 0.0, %v678
        %680 = vmatmul.f32.gmra.mxu0 %v562
        %v681 = vpop.f32.mrf.mxu0
        %v682 = vadd.f32 0.0, %v681
        %683 = vmatmul.f32.gmra.mxu0 %v564
        %v684 = vpop.f32.mrf.mxu0
        %v685 = vadd.f32 0.0, %v684
        %686 = vmatmul.f32.gmra.mxu0 %v566
        %v687 = vpop.f32.mrf.mxu0
        %v688 = vadd.f32 0.0, %v687
        %689 = vmatmul.f32.gmra.mxu0 %v568
        %v690 = vpop.f32.mrf.mxu0
        %v691 = vadd.f32 0.0, %v690
        %692 = vmatmul.f32.gmra.mxu0 %v570
        %v693 = vpop.f32.mrf.mxu0
        %v694 = vadd.f32 0.0, %v693
        %695 = vmatmul.f32.gmra.mxu0 %v572
        %v696 = vpop.f32.mrf.mxu0
        %v697 = vadd.f32 0.0, %v696
        %698 = vmatmul.f32.gmra.mxu0 %v574
        %v699 = vpop.f32.mrf.mxu0
        %v700 = vadd.f32 0.0, %v699
        %701 = vmatmul.f32.gmra.mxu0 %v576
        %v702 = vpop.f32.mrf.mxu0
        %v703 = vadd.f32 0.0, %v702
        %704 = vmatmul.f32.gmra.mxu0 %v578
        %v705 = vpop.f32.mrf.mxu0
        %v706 = vadd.f32 0.0, %v705
        %707 = vmatmul.f32.gmra.mxu0 %v580
        %v708 = vpop.f32.mrf.mxu0
        %v709 = vadd.f32 0.0, %v708
        %710 = vdwg.mxu0
        %711 = vmatpush.msra.mxu0 %v645
        %712 = vmatpush.msra.mxu0 %v644
        %713 = vmatpush.msra.mxu0 %v643
        %714 = vmatpush.msra.mxu0 %v642
        %715 = vmatpush.msra.mxu0 %v641
        %716 = vmatpush.msra.mxu0 %v640
        %717 = vmatpush.msra.mxu0 %v639
        %718 = vmatpush.msra.mxu0 %v638
        %719 = vmatpush.msra.mxu0 %v637
        %720 = vmatpush.msra.mxu0 %v636
        %721 = vmatpush.msra.mxu0 %v635
        %722 = vmatpush.msra.mxu0 %v634
        %723 = vmatpush.msra.mxu0 %v633
        %724 = vmatpush.msra.mxu0 %v632
        %725 = vmatpush.msra.mxu0 %v631
        %726 = vmatpush.msra.mxu0 %v630
        %727 = vmatmul.f32.gmra.mxu0 %v551
        %v728 = vpop.f32.mrf.mxu0
        %v729 = vadd.f32 %v664, %v728
        %730 = vmatmul.f32.gmra.mxu0 %v553
        %v731 = vpop.f32.mrf.mxu0
        %v732 = vadd.f32 %v667, %v731
        %733 = vmatmul.f32.gmra.mxu0 %v555
        %v734 = vpop.f32.mrf.mxu0
        %v735 = vadd.f32 %v670, %v734
        %736 = vmatmul.f32.gmra.mxu0 %v557
        %v737 = vpop.f32.mrf.mxu0
        %v738 = vadd.f32 %v673, %v737
        %739 = vmatmul.f32.gmra.mxu0 %v559
        %v740 = vpop.f32.mrf.mxu0
        %v741 = vadd.f32 %v676, %v740
        %742 = vmatmul.f32.gmra.mxu0 %v561
        %v743 = vpop.f32.mrf.mxu0
        %v744 = vadd.f32 %v679, %v743
        %745 = vmatmul.f32.gmra.mxu0 %v563
        %v746 = vpop.f32.mrf.mxu0
        %v747 = vadd.f32 %v682, %v746
        %748 = vmatmul.f32.gmra.mxu0 %v565
        %v749 = vpop.f32.mrf.mxu0
        %v750 = vadd.f32 %v685, %v749
        %751 = vmatmul.f32.gmra.mxu0 %v567
        %v752 = vpop.f32.mrf.mxu0
        %v753 = vadd.f32 %v688, %v752
        %754 = vmatmul.f32.gmra.mxu0 %v569
        %v755 = vpop.f32.mrf.mxu0
        %v756 = vadd.f32 %v691, %v755
        %757 = vmatmul.f32.gmra.mxu0 %v571
        %v758 = vpop.f32.mrf.mxu0
        %v759 = vadd.f32 %v694, %v758
        %760 = vmatmul.f32.gmra.mxu0 %v573
        %v761 = vpop.f32.mrf.mxu0
        %v762 = vadd.f32 %v697, %v761
        %763 = vmatmul.f32.gmra.mxu0 %v575
        %v764 = vpop.f32.mrf.mxu0
        %v765 = vadd.f32 %v700, %v764
        %766 = vmatmul.f32.gmra.mxu0 %v577
        %v767 = vpop.f32.mrf.mxu0
        %v768 = vadd.f32 %v703, %v767
        %769 = vmatmul.f32.gmra.mxu0 %v579
        %v770 = vpop.f32.mrf.mxu0
        %v771 = vadd.f32 %v706, %v770
        %772 = vmatmul.f32.gmra.mxu0 %v581
        %v773 = vpop.f32.mrf.mxu0
        %v774 = vadd.f32 %v709, %v773
        %775 = vdwg.mxu0
        %v776 = vld [vmem:[%s436] sm:$0xff]
        %v777 = vld [vmem:[%s436 + $0x8] sm:$0xff]
        %v778 = vld [vmem:[%s436 + $0x10] sm:$0xff]
        %v779 = vld [vmem:[%s436 + $0x18] sm:$0xff]
        %v780 = vld [vmem:[%s436 + $0x20] sm:$0xff]
        %v781 = vld [vmem:[%s436 + $0x28] sm:$0xff]
        %v782 = vld [vmem:[%s436 + $0x30] sm:$0xff]
        %v783 = vld [vmem:[%s436 + $0x38] sm:$0xff]
        %v784 = vld [vmem:[%s436 + $0x40] sm:$0xff]
        %v785 = vld [vmem:[%s436 + $0x48] sm:$0xff]
        %v786 = vld [vmem:[%s436 + $0x50] sm:$0xff]
        %v787 = vld [vmem:[%s436 + $0x58] sm:$0xff]
        %v788 = vld [vmem:[%s436 + $0x60] sm:$0xff]
        %v789 = vld [vmem:[%s436 + $0x68] sm:$0xff]
        %v790 = vld [vmem:[%s436 + $0x70] sm:$0xff]
        %v791 = vld [vmem:[%s436 + $0x78] sm:$0xff]
        %v792 = vld [vmem:[%s436 + $0x80] sm:$0xff]
        %v793 = vld [vmem:[%s436 + $0x88] sm:$0xff]
        %v794 = vld [vmem:[%s436 + $0x90] sm:$0xff]
        %v795 = vld [vmem:[%s436 + $0x98] sm:$0xff]
        %v796 = vld [vmem:[%s436 + $0xa0] sm:$0xff]
        %v797 = vld [vmem:[%s436 + $0xa8] sm:$0xff]
        %v798 = vld [vmem:[%s436 + $0xb0] sm:$0xff]
        %v799 = vld [vmem:[%s436 + $0xb8] sm:$0xff]
        %v800 = vld [vmem:[%s436 + $0xc0] sm:$0xff]
        %v801 = vld [vmem:[%s436 + $0xc8] sm:$0xff]
        %v802 = vld [vmem:[%s436 + $0xd0] sm:$0xff]
        %v803 = vld [vmem:[%s436 + $0xd8] sm:$0xff]
        %v804 = vld [vmem:[%s436 + $0xe0] sm:$0xff]
        %v805 = vld [vmem:[%s436 + $0xe8] sm:$0xff]
        %v806 = vld [vmem:[%s436 + $0xf0] sm:$0xff]
        %v807 = vld [vmem:[%s436 + $0xf8] sm:$0xff]
        %808 = vmatpush.msra.mxu0 %v791
        %809 = vmatpush.msra.mxu0 %v790
        %810 = vmatpush.msra.mxu0 %v789
        %811 = vmatpush.msra.mxu0 %v788
        %812 = vmatpush.msra.mxu0 %v787
        %813 = vmatpush.msra.mxu0 %v786
        %814 = vmatpush.msra.mxu0 %v785
        %815 = vmatpush.msra.mxu0 %v784
        %816 = vmatpush.msra.mxu0 %v783
        %817 = vmatpush.msra.mxu0 %v782
        %818 = vmatpush.msra.mxu0 %v781
        %819 = vmatpush.msra.mxu0 %v780
        %820 = vmatpush.msra.mxu0 %v779
        %821 = vmatpush.msra.mxu0 %v778
        %822 = vmatpush.msra.mxu0 %v777
        %823 = vmatpush.msra.mxu0 %v776
        %824 = vmatmul.f32.gmra.mxu0 %v582
        %v825 = vpop.f32.mrf.mxu0
        %v826 = vadd.f32 0.0, %v825
        %827 = vmatmul.f32.gmra.mxu0 %v584
        %v828 = vpop.f32.mrf.mxu0
        %v829 = vadd.f32 0.0, %v828
        %830 = vmatmul.f32.gmra.mxu0 %v586
        %v831 = vpop.f32.mrf.mxu0
        %v832 = vadd.f32 0.0, %v831
        %833 = vmatmul.f32.gmra.mxu0 %v588
        %v834 = vpop.f32.mrf.mxu0
        %v835 = vadd.f32 0.0, %v834
        %836 = vmatmul.f32.gmra.mxu0 %v590
        %v837 = vpop.f32.mrf.mxu0
        %v838 = vadd.f32 0.0, %v837
        %839 = vmatmul.f32.gmra.mxu0 %v592
        %v840 = vpop.f32.mrf.mxu0
        %v841 = vadd.f32 0.0, %v840
        %842 = vmatmul.f32.gmra.mxu0 %v594
        %v843 = vpop.f32.mrf.mxu0
        %v844 = vadd.f32 0.0, %v843
        %845 = vmatmul.f32.gmra.mxu0 %v596
        %v846 = vpop.f32.mrf.mxu0
        %v847 = vadd.f32 0.0, %v846
        %848 = vmatmul.f32.gmra.mxu0 %v598
        %v849 = vpop.f32.mrf.mxu0
        %v850 = vadd.f32 0.0, %v849
        %851 = vmatmul.f32.gmra.mxu0 %v600
        %v852 = vpop.f32.mrf.mxu0
        %v853 = vadd.f32 0.0, %v852
        %854 = vmatmul.f32.gmra.mxu0 %v602
        %v855 = vpop.f32.mrf.mxu0
        %v856 = vadd.f32 0.0, %v855
        %857 = vmatmul.f32.gmra.mxu0 %v604
        %v858 = vpop.f32.mrf.mxu0
        %v859 = vadd.f32 0.0, %v858
        %860 = vmatmul.f32.gmra.mxu0 %v606
        %v861 = vpop.f32.mrf.mxu0
        %v862 = vadd.f32 0.0, %v861
        %863 = vmatmul.f32.gmra.mxu0 %v608
        %v864 = vpop.f32.mrf.mxu0
        %v865 = vadd.f32 0.0, %v864
        %866 = vmatmul.f32.gmra.mxu0 %v610
        %v867 = vpop.f32.mrf.mxu0
        %v868 = vadd.f32 0.0, %v867
        %869 = vmatmul.f32.gmra.mxu0 %v612
        %v870 = vpop.f32.mrf.mxu0
        %v871 = vadd.f32 0.0, %v870
        %872 = vdwg.mxu0
        %873 = vmatpush.msra.mxu0 %v807
        %874 = vmatpush.msra.mxu0 %v806
        %875 = vmatpush.msra.mxu0 %v805
        %876 = vmatpush.msra.mxu0 %v804
        %877 = vmatpush.msra.mxu0 %v803
        %878 = vmatpush.msra.mxu0 %v802
        %879 = vmatpush.msra.mxu0 %v801
        %880 = vmatpush.msra.mxu0 %v800
        %881 = vmatpush.msra.mxu0 %v799
        %882 = vmatpush.msra.mxu0 %v798
        %883 = vmatpush.msra.mxu0 %v797
        %884 = vmatpush.msra.mxu0 %v796
        %885 = vmatpush.msra.mxu0 %v795
        %886 = vmatpush.msra.mxu0 %v794
        %887 = vmatpush.msra.mxu0 %v793
        %888 = vmatpush.msra.mxu0 %v792
        %889 = vmatmul.f32.gmra.mxu0 %v583
        %v890 = vpop.f32.mrf.mxu0
        %v891 = vadd.f32 %v826, %v890
        %892 = vmatmul.f32.gmra.mxu0 %v585
        %v893 = vpop.f32.mrf.mxu0
        %v894 = vadd.f32 %v829, %v893
        %895 = vmatmul.f32.gmra.mxu0 %v587
        %v896 = vpop.f32.mrf.mxu0
        %v897 = vadd.f32 %v832, %v896
        %898 = vmatmul.f32.gmra.mxu0 %v589
        %v899 = vpop.f32.mrf.mxu0
        %v900 = vadd.f32 %v835, %v899
        %901 = vmatmul.f32.gmra.mxu0 %v591
        %v902 = vpop.f32.mrf.mxu0
        %v903 = vadd.f32 %v838, %v902
        %904 = vmatmul.f32.gmra.mxu0 %v593
        %v905 = vpop.f32.mrf.mxu0
        %v906 = vadd.f32 %v841, %v905
        %907 = vmatmul.f32.gmra.mxu0 %v595
        %v908 = vpop.f32.mrf.mxu0
        %v909 = vadd.f32 %v844, %v908
        %910 = vmatmul.f32.gmra.mxu0 %v597
        %v911 = vpop.f32.mrf.mxu0
        %v912 = vadd.f32 %v847, %v911
        %913 = vmatmul.f32.gmra.mxu0 %v599
        %v914 = vpop.f32.mrf.mxu0
        %v915 = vadd.f32 %v850, %v914
        %916 = vmatmul.f32.gmra.mxu0 %v601
        %v917 = vpop.f32.mrf.mxu0
        %v918 = vadd.f32 %v853, %v917
        %919 = vmatmul.f32.gmra.mxu0 %v603
        %v920 = vpop.f32.mrf.mxu0
        %v921 = vadd.f32 %v856, %v920
        %922 = vmatmul.f32.gmra.mxu0 %v605
        %v923 = vpop.f32.mrf.mxu0
        %v924 = vadd.f32 %v859, %v923
        %925 = vmatmul.f32.gmra.mxu0 %v607
        %v926 = vpop.f32.mrf.mxu0
        %v927 = vadd.f32 %v862, %v926
        %928 = vmatmul.f32.gmra.mxu0 %v609
        %v929 = vpop.f32.mrf.mxu0
        %v930 = vadd.f32 %v865, %v929
        %931 = vmatmul.f32.gmra.mxu0 %v611
        %v932 = vpop.f32.mrf.mxu0
        %v933 = vadd.f32 %v868, %v932
        %934 = vmatmul.f32.gmra.mxu0 %v613
        %v935 = vpop.f32.mrf.mxu0
        %v936 = vadd.f32 %v871, %v935
        %937 = vdwg.mxu0
        %v938 = vld [vmem:[%s446] sm:$0xff]
        %v939 = vld [vmem:[%s446 + $0x8] sm:$0xff]
        %v940 = vld [vmem:[%s446 + $0x10] sm:$0xff]
        %v941 = vld [vmem:[%s446 + $0x18] sm:$0xff]
        %v942 = vld [vmem:[%s446 + $0x20] sm:$0xff]
        %v943 = vld [vmem:[%s446 + $0x28] sm:$0xff]
        %v944 = vld [vmem:[%s446 + $0x30] sm:$0xff]
        %v945 = vld [vmem:[%s446 + $0x38] sm:$0xff]
        %v946 = vld [vmem:[%s446 + $0x40] sm:$0xff]
        %v947 = vld [vmem:[%s446 + $0x48] sm:$0xff]
        %v948 = vld [vmem:[%s446 + $0x50] sm:$0xff]
        %v949 = vld [vmem:[%s446 + $0x58] sm:$0xff]
        %v950 = vld [vmem:[%s446 + $0x60] sm:$0xff]
        %v951 = vld [vmem:[%s446 + $0x68] sm:$0xff]
        %v952 = vld [vmem:[%s446 + $0x70] sm:$0xff]
        %v953 = vld [vmem:[%s446 + $0x78] sm:$0xff]
        %v954 = vld [vmem:[%s446 + $0x80] sm:$0xff]
        %v955 = vld [vmem:[%s446 + $0x88] sm:$0xff]
        %v956 = vld [vmem:[%s446 + $0x90] sm:$0xff]
        %v957 = vld [vmem:[%s446 + $0x98] sm:$0xff]
        %v958 = vld [vmem:[%s446 + $0xa0] sm:$0xff]
        %v959 = vld [vmem:[%s446 + $0xa8] sm:$0xff]
        %v960 = vld [vmem:[%s446 + $0xb0] sm:$0xff]
        %v961 = vld [vmem:[%s446 + $0xb8] sm:$0xff]
        %v962 = vld [vmem:[%s446 + $0xc0] sm:$0xff]
        %v963 = vld [vmem:[%s446 + $0xc8] sm:$0xff]
        %v964 = vld [vmem:[%s446 + $0xd0] sm:$0xff]
        %v965 = vld [vmem:[%s446 + $0xd8] sm:$0xff]
        %v966 = vld [vmem:[%s446 + $0xe0] sm:$0xff]
        %v967 = vld [vmem:[%s446 + $0xe8] sm:$0xff]
        %v968 = vld [vmem:[%s446 + $0xf0] sm:$0xff]
        %v969 = vld [vmem:[%s446 + $0xf8] sm:$0xff]
        %970 = vmatpush.msra.mxu0 %v953
        %971 = vmatpush.msra.mxu0 %v952
        %972 = vmatpush.msra.mxu0 %v951
        %973 = vmatpush.msra.mxu0 %v950
        %974 = vmatpush.msra.mxu0 %v949
        %975 = vmatpush.msra.mxu0 %v948
        %976 = vmatpush.msra.mxu0 %v947
        %977 = vmatpush.msra.mxu0 %v946
        %978 = vmatpush.msra.mxu0 %v945
        %979 = vmatpush.msra.mxu0 %v944
        %980 = vmatpush.msra.mxu0 %v943
        %981 = vmatpush.msra.mxu0 %v942
        %982 = vmatpush.msra.mxu0 %v941
        %983 = vmatpush.msra.mxu0 %v940
        %984 = vmatpush.msra.mxu0 %v939
        %985 = vmatpush.msra.mxu0 %v938
        %986 = vmatmul.f32.gmra.mxu0 %v582
        %v987 = vpop.f32.mrf.mxu0
        %v988 = vadd.f32 0.0, %v987
        %989 = vmatmul.f32.gmra.mxu0 %v584
        %v990 = vpop.f32.mrf.mxu0
        %v991 = vadd.f32 0.0, %v990
        %992 = vmatmul.f32.gmra.mxu0 %v586
        %v993 = vpop.f32.mrf.mxu0
        %v994 = vadd.f32 0.0, %v993
        %995 = vmatmul.f32.gmra.mxu0 %v588
        %v996 = vpop.f32.mrf.mxu0
        %v997 = vadd.f32 0.0, %v996
        %998 = vmatmul.f32.gmra.mxu0 %v590
        %v999 = vpop.f32.mrf.mxu0
        %v1000 = vadd.f32 0.0, %v999
        %1001 = vmatmul.f32.gmra.mxu0 %v592
        %v1002 = vpop.f32.mrf.mxu0
        %v1003 = vadd.f32 0.0, %v1002
        %1004 = vmatmul.f32.gmra.mxu0 %v594
        %v1005 = vpop.f32.mrf.mxu0
        %v1006 = vadd.f32 0.0, %v1005
        %1007 = vmatmul.f32.gmra.mxu0 %v596
        %v1008 = vpop.f32.mrf.mxu0
        %v1009 = vadd.f32 0.0, %v1008
        %1010 = vmatmul.f32.gmra.mxu0 %v598
        %v1011 = vpop.f32.mrf.mxu0
        %v1012 = vadd.f32 0.0, %v1011
        %1013 = vmatmul.f32.gmra.mxu0 %v600
        %v1014 = vpop.f32.mrf.mxu0
        %v1015 = vadd.f32 0.0, %v1014
        %1016 = vmatmul.f32.gmra.mxu0 %v602
        %v1017 = vpop.f32.mrf.mxu0
        %v1018 = vadd.f32 0.0, %v1017
        %1019 = vmatmul.f32.gmra.mxu0 %v604
        %v1020 = vpop.f32.mrf.mxu0
        %v1021 = vadd.f32 0.0, %v1020
        %1022 = vmatmul.f32.gmra.mxu0 %v606
        %v1023 = vpop.f32.mrf.mxu0
        %v1024 = vadd.f32 0.0, %v1023
        %1025 = vmatmul.f32.gmra.mxu0 %v608
        %v1026 = vpop.f32.mrf.mxu0
        %v1027 = vadd.f32 0.0, %v1026
        %1028 = vmatmul.f32.gmra.mxu0 %v610
        %v1029 = vpop.f32.mrf.mxu0
        %v1030 = vadd.f32 0.0, %v1029
        %1031 = vmatmul.f32.gmra.mxu0 %v612
        %v1032 = vpop.f32.mrf.mxu0
        %v1033 = vadd.f32 0.0, %v1032
        %1034 = vdwg.mxu0
        %1035 = vmatpush.msra.mxu0 %v969
        %1036 = vmatpush.msra.mxu0 %v968
        %1037 = vmatpush.msra.mxu0 %v967
        %1038 = vmatpush.msra.mxu0 %v966
        %1039 = vmatpush.msra.mxu0 %v965
        %1040 = vmatpush.msra.mxu0 %v964
        %1041 = vmatpush.msra.mxu0 %v963
        %1042 = vmatpush.msra.mxu0 %v962
        %1043 = vmatpush.msra.mxu0 %v961
        %1044 = vmatpush.msra.mxu0 %v960
        %1045 = vmatpush.msra.mxu0 %v959
        %1046 = vmatpush.msra.mxu0 %v958
        %1047 = vmatpush.msra.mxu0 %v957
        %1048 = vmatpush.msra.mxu0 %v956
        %1049 = vmatpush.msra.mxu0 %v955
        %1050 = vmatpush.msra.mxu0 %v954
        %1051 = vmatmul.f32.gmra.mxu0 %v583
        %v1052 = vpop.f32.mrf.mxu0
        %v1053 = vadd.f32 %v988, %v1052
        %1054 = vmatmul.f32.gmra.mxu0 %v585
        %v1055 = vpop.f32.mrf.mxu0
        %v1056 = vadd.f32 %v991, %v1055
        %1057 = vmatmul.f32.gmra.mxu0 %v587
        %v1058 = vpop.f32.mrf.mxu0
        %v1059 = vadd.f32 %v994, %v1058
        %1060 = vmatmul.f32.gmra.mxu0 %v589
        %v1061 = vpop.f32.mrf.mxu0
        %v1062 = vadd.f32 %v997, %v1061
        %1063 = vmatmul.f32.gmra.mxu0 %v591
        %v1064 = vpop.f32.mrf.mxu0
        %v1065 = vadd.f32 %v1000, %v1064
        %1066 = vmatmul.f32.gmra.mxu0 %v593
        %v1067 = vpop.f32.mrf.mxu0
        %v1068 = vadd.f32 %v1003, %v1067
        %1069 = vmatmul.f32.gmra.mxu0 %v595
        %v1070 = vpop.f32.mrf.mxu0
        %v1071 = vadd.f32 %v1006, %v1070
        %1072 = vmatmul.f32.gmra.mxu0 %v597
        %v1073 = vpop.f32.mrf.mxu0
        %v1074 = vadd.f32 %v1009, %v1073
        %1075 = vmatmul.f32.gmra.mxu0 %v599
        %v1076 = vpop.f32.mrf.mxu0
        %v1077 = vadd.f32 %v1012, %v1076
        %1078 = vmatmul.f32.gmra.mxu0 %v601
        %v1079 = vpop.f32.mrf.mxu0
        %v1080 = vadd.f32 %v1015, %v1079
        %1081 = vmatmul.f32.gmra.mxu0 %v603
        %v1082 = vpop.f32.mrf.mxu0
        %v1083 = vadd.f32 %v1018, %v1082
        %1084 = vmatmul.f32.gmra.mxu0 %v605
        %v1085 = vpop.f32.mrf.mxu0
        %v1086 = vadd.f32 %v1021, %v1085
        %1087 = vmatmul.f32.gmra.mxu0 %v607
        %v1088 = vpop.f32.mrf.mxu0
        %v1089 = vadd.f32 %v1024, %v1088
        %1090 = vmatmul.f32.gmra.mxu0 %v609
        %v1091 = vpop.f32.mrf.mxu0
        %v1092 = vadd.f32 %v1027, %v1091
        %1093 = vmatmul.f32.gmra.mxu0 %v611
        %v1094 = vpop.f32.mrf.mxu0
        %v1095 = vadd.f32 %v1030, %v1094
        %1096 = vmatmul.f32.gmra.mxu0 %v613
        %v1097 = vpop.f32.mrf.mxu0
        %v1098 = vadd.f32 %v1033, %v1097
        %1099 = vdwg.mxu0
        %1100 = vmatpush.xpose.msra.mxu0 %v936
        %1101 = vmatpush.xpose.msra.mxu0 %v933
        %1102 = vmatpush.xpose.msra.mxu0 %v930
        %1103 = vmatpush.xpose.msra.mxu0 %v927
        %1104 = vmatpush.xpose.msra.mxu0 %v924
        %1105 = vmatpush.xpose.msra.mxu0 %v921
        %1106 = vmatpush.xpose.msra.mxu0 %v918
        %1107 = vmatpush.xpose.msra.mxu0 %v915
        %1108 = vmatpush.xpose.msra.mxu0 %v912
        %1109 = vmatpush.xpose.msra.mxu0 %v909
        %1110 = vmatpush.xpose.msra.mxu0 %v906
        %1111 = vmatpush.xpose.msra.mxu0 %v903
        %1112 = vmatpush.xpose.msra.mxu0 %v900
        %1113 = vmatpush.xpose.msra.mxu0 %v897
        %1114 = vmatpush.xpose.msra.mxu0 %v894
        %1115 = vmatpush.xpose.msra.mxu0 %v891
        %1116 = vmatmul.f32.gmra.mxu0 %v729
        %v1117 = vpop.f32.mrf.mxu0
        %v1118 = vadd.f32 0.0, %v1117
        %1119 = vmatmul.f32.gmra.mxu0 %v732
        %v1120 = vpop.f32.mrf.mxu0
        %v1121 = vadd.f32 0.0, %v1120
        %1122 = vmatmul.f32.gmra.mxu0 %v735
        %v1123 = vpop.f32.mrf.mxu0
        %v1124 = vadd.f32 0.0, %v1123
        %1125 = vmatmul.f32.gmra.mxu0 %v738
        %v1126 = vpop.f32.mrf.mxu0
        %v1127 = vadd.f32 0.0, %v1126
        %1128 = vmatmul.f32.gmra.mxu0 %v741
        %v1129 = vpop.f32.mrf.mxu0
        %v1130 = vadd.f32 0.0, %v1129
        %1131 = vmatmul.f32.gmra.mxu0 %v744
        %v1132 = vpop.f32.mrf.mxu0
        %v1133 = vadd.f32 0.0, %v1132
        %1134 = vmatmul.f32.gmra.mxu0 %v747
        %v1135 = vpop.f32.mrf.mxu0
        %v1136 = vadd.f32 0.0, %v1135
        %1137 = vmatmul.f32.gmra.mxu0 %v750
        %v1138 = vpop.f32.mrf.mxu0
        %v1139 = vadd.f32 0.0, %v1138
        %1140 = vmatmul.f32.gmra.mxu0 %v753
        %v1141 = vpop.f32.mrf.mxu0
        %v1142 = vadd.f32 0.0, %v1141
        %1143 = vmatmul.f32.gmra.mxu0 %v756
        %v1144 = vpop.f32.mrf.mxu0
        %v1145 = vadd.f32 0.0, %v1144
        %1146 = vmatmul.f32.gmra.mxu0 %v759
        %v1147 = vpop.f32.mrf.mxu0
        %v1148 = vadd.f32 0.0, %v1147
        %1149 = vmatmul.f32.gmra.mxu0 %v762
        %v1150 = vpop.f32.mrf.mxu0
        %v1151 = vadd.f32 0.0, %v1150
        %1152 = vmatmul.f32.gmra.mxu0 %v765
        %v1153 = vpop.f32.mrf.mxu0
        %v1154 = vadd.f32 0.0, %v1153
        %1155 = vmatmul.f32.gmra.mxu0 %v768
        %v1156 = vpop.f32.mrf.mxu0
        %v1157 = vadd.f32 0.0, %v1156
        %1158 = vmatmul.f32.gmra.mxu0 %v771
        %v1159 = vpop.f32.mrf.mxu0
        %v1160 = vadd.f32 0.0, %v1159
        %1161 = vmatmul.f32.gmra.mxu0 %v774
        %v1162 = vpop.f32.mrf.mxu0
        %v1163 = vadd.f32 0.0, %v1162
        %1164 = vdwg.mxu0
        %v1165 = vmul.f32 %v1118, 0.088388346
        %v1166 = vmul.f32 %v1121, 0.088388346
        %v1167 = vmul.f32 %v1124, 0.088388346
        %v1168 = vmul.f32 %v1127, 0.088388346
        %v1169 = vmul.f32 %v1130, 0.088388346
        %v1170 = vmul.f32 %v1133, 0.088388346
        %v1171 = vmul.f32 %v1136, 0.088388346
        %v1172 = vmul.f32 %v1139, 0.088388346
        %v1173 = vmul.f32 %v1142, 0.088388346
        %v1174 = vmul.f32 %v1145, 0.088388346
        %v1175 = vmul.f32 %v1148, 0.088388346
        %v1176 = vmul.f32 %v1151, 0.088388346
        %v1177 = vmul.f32 %v1154, 0.088388346
        %v1178 = vmul.f32 %v1157, 0.088388346
        %v1179 = vmul.f32 %v1160, 0.088388346
        %v1180 = vmul.f32 %v1163, 0.088388346
        %1181 = vmax.xlane.f32.xlu0 %v1165
        %v1182 = vpop.xlane.xlu0 %1181
        %1183 = vmax.xlane.f32.xlu0 %v1166
        %v1184 = vpop.xlane.xlu0 %1183
        %1185 = vmax.xlane.f32.xlu0 %v1167
        %v1186 = vpop.xlane.xlu0 %1185
        %1187 = vmax.xlane.f32.xlu0 %v1168
        %v1188 = vpop.xlane.xlu0 %1187
        %1189 = vmax.xlane.f32.xlu0 %v1169
        %v1190 = vpop.xlane.xlu0 %1189
        %1191 = vmax.xlane.f32.xlu0 %v1170
        %v1192 = vpop.xlane.xlu0 %1191
        %1193 = vmax.xlane.f32.xlu0 %v1171
        %v1194 = vpop.xlane.xlu0 %1193
        %1195 = vmax.xlane.f32.xlu0 %v1172
        %v1196 = vpop.xlane.xlu0 %1195
        %1197 = vmax.xlane.f32.xlu0 %v1173
        %v1198 = vpop.xlane.xlu0 %1197
        %1199 = vmax.xlane.f32.xlu0 %v1174
        %v1200 = vpop.xlane.xlu0 %1199
        %1201 = vmax.xlane.f32.xlu0 %v1175
        %v1202 = vpop.xlane.xlu0 %1201
        %1203 = vmax.xlane.f32.xlu0 %v1176
        %v1204 = vpop.xlane.xlu0 %1203
        %1205 = vmax.xlane.f32.xlu0 %v1177
        %v1206 = vpop.xlane.xlu0 %1205
        %1207 = vmax.xlane.f32.xlu0 %v1178
        %v1208 = vpop.xlane.xlu0 %1207
        %1209 = vmax.xlane.f32.xlu0 %v1179
        %v1210 = vpop.xlane.xlu0 %1209
        %1211 = vmax.xlane.f32.xlu0 %v1180
        %v1212 = vpop.xlane.xlu0 %1211
        %v1213 = vsub.f32 %v1165, %v1182
        %v1214 = vsub.f32 %v1166, %v1184
        %v1215 = vsub.f32 %v1167, %v1186
        %v1216 = vsub.f32 %v1168, %v1188
        %v1217 = vsub.f32 %v1169, %v1190
        %v1218 = vsub.f32 %v1170, %v1192
        %v1219 = vsub.f32 %v1171, %v1194
        %v1220 = vsub.f32 %v1172, %v1196
        %v1221 = vsub.f32 %v1173, %v1198
        %v1222 = vsub.f32 %v1174, %v1200
        %v1223 = vsub.f32 %v1175, %v1202
        %v1224 = vsub.f32 %v1176, %v1204
        %v1225 = vsub.f32 %v1177, %v1206
        %v1226 = vsub.f32 %v1178, %v1208
        %v1227 = vsub.f32 %v1179, %v1210
        %v1228 = vsub.f32 %v1180, %v1212
        %v1229 = vmul.f32 %v1213, 1.442695
        %v1230 = vpow.pop %v1229
        %v1231 = vmul.f32 %v1214, 1.442695
        %v1232 = vpow.pop %v1231
        %v1233 = vmul.f32 %v1215, 1.442695
        %v1234 = vpow.pop %v1233
        %v1235 = vmul.f32 %v1216, 1.442695
        %v1236 = vpow.pop %v1235
        %v1237 = vmul.f32 %v1217, 1.442695
        %v1238 = vpow.pop %v1237
        %v1239 = vmul.f32 %v1218, 1.442695
        %v1240 = vpow.pop %v1239
        %v1241 = vmul.f32 %v1219, 1.442695
        %v1242 = vpow.pop %v1241
        %v1243 = vmul.f32 %v1220, 1.442695
        %v1244 = vpow.pop %v1243
        %v1245 = vmul.f32 %v1221, 1.442695
        %v1246 = vpow.pop %v1245
        %v1247 = vmul.f32 %v1222, 1.442695
        %v1248 = vpow.pop %v1247
        %v1249 = vmul.f32 %v1223, 1.442695
        %v1250 = vpow.pop %v1249
        %v1251 = vmul.f32 %v1224, 1.442695
        %v1252 = vpow.pop %v1251
        %v1253 = vmul.f32 %v1225, 1.442695
        %v1254 = vpow.pop %v1253
        %v1255 = vmul.f32 %v1226, 1.442695
        %v1256 = vpow.pop %v1255
        %v1257 = vmul.f32 %v1227, 1.442695
        %v1258 = vpow.pop %v1257
        %v1259 = vmul.f32 %v1228, 1.442695
        %v1260 = vpow.pop %v1259
        %1261 = vadd.xlane.f32.xlu0 %v1230
        %v1262 = vpop.xlane.xlu0 %1261
        %1263 = vadd.xlane.f32.xlu0 %v1232
        %v1264 = vpop.xlane.xlu0 %1263
        %1265 = vadd.xlane.f32.xlu0 %v1234
        %v1266 = vpop.xlane.xlu0 %1265
        %1267 = vadd.xlane.f32.xlu0 %v1236
        %v1268 = vpop.xlane.xlu0 %1267
        %1269 = vadd.xlane.f32.xlu0 %v1238
        %v1270 = vpop.xlane.xlu0 %1269
        %1271 = vadd.xlane.f32.xlu0 %v1240
        %v1272 = vpop.xlane.xlu0 %1271
        %1273 = vadd.xlane.f32.xlu0 %v1242
        %v1274 = vpop.xlane.xlu0 %1273
        %1275 = vadd.xlane.f32.xlu0 %v1244
        %v1276 = vpop.xlane.xlu0 %1275
        %1277 = vadd.xlane.f32.xlu0 %v1246
        %v1278 = vpop.xlane.xlu0 %1277
        %1279 = vadd.xlane.f32.xlu0 %v1248
        %v1280 = vpop.xlane.xlu0 %1279
        %1281 = vadd.xlane.f32.xlu0 %v1250
        %v1282 = vpop.xlane.xlu0 %1281
        %1283 = vadd.xlane.f32.xlu0 %v1252
        %v1284 = vpop.xlane.xlu0 %1283
        %1285 = vadd.xlane.f32.xlu0 %v1254
        %v1286 = vpop.xlane.xlu0 %1285
        %1287 = vadd.xlane.f32.xlu0 %v1256
        %v1288 = vpop.xlane.xlu0 %1287
        %1289 = vadd.xlane.f32.xlu0 %v1258
        %v1290 = vpop.xlane.xlu0 %1289
        %1291 = vadd.xlane.f32.xlu0 %v1260
        %v1292 = vpop.xlane.xlu0 %1291
        %v1293 = vrcp.pop %v1262
        %v1294 = vmul.f32 %v1262, %v1293
        %v1295 = vsub.f32 1.0, %v1294
        %v1296 = vmul.f32 %v1293, %v1295
        %v1297 = vadd.f32 %v1293, %v1296
        %vm1298 = vweird.f32 %v1262
        %vm1299 = vweird.f32 %v1293
        %vm1300 = vmor %vm1298, %vm1299
        %v1301 = vsel %vm1300, %v1293, %v1297
        %v1302 = vand.u32 2147483647, %v1262
        %vm1303 = vcmp.eq.f32.partialorder %v1302, 8.507059e+37
        %v1304 = vand.u32 %v1262, 2147483648
        %v1305 = vor.u32 1.1754944e-38, %v1304
        %v1306 = vsel %vm1303, %v1305, %v1301
        %v1307 = vmul.f32 %v1230, %v1306
        %v1308 = vrcp.pop %v1264
        %v1309 = vmul.f32 %v1264, %v1308
        %v1310 = vsub.f32 1.0, %v1309
        %v1311 = vmul.f32 %v1308, %v1310
        %v1312 = vadd.f32 %v1308, %v1311
        %vm1313 = vweird.f32 %v1264
        %vm1314 = vweird.f32 %v1308
        %vm1315 = vmor %vm1313, %vm1314
        %v1316 = vsel %vm1315, %v1308, %v1312
        %v1317 = vand.u32 2147483647, %v1264
        %vm1318 = vcmp.eq.f32.partialorder %v1317, 8.507059e+37
        %v1319 = vand.u32 %v1264, 2147483648
        %v1320 = vor.u32 1.1754944e-38, %v1319
        %v1321 = vsel %vm1318, %v1320, %v1316
        %v1322 = vmul.f32 %v1232, %v1321
        %v1323 = vrcp.pop %v1266
        %v1324 = vmul.f32 %v1266, %v1323
        %v1325 = vsub.f32 1.0, %v1324
        %v1326 = vmul.f32 %v1323, %v1325
        %v1327 = vadd.f32 %v1323, %v1326
        %vm1328 = vweird.f32 %v1266
        %vm1329 = vweird.f32 %v1323
        %vm1330 = vmor %vm1328, %vm1329
        %v1331 = vsel %vm1330, %v1323, %v1327
        %v1332 = vand.u32 2147483647, %v1266
        %vm1333 = vcmp.eq.f32.partialorder %v1332, 8.507059e+37
        %v1334 = vand.u32 %v1266, 2147483648
        %v1335 = vor.u32 1.1754944e-38, %v1334
        %v1336 = vsel %vm1333, %v1335, %v1331
        %v1337 = vmul.f32 %v1234, %v1336
        %v1338 = vrcp.pop %v1268
        %v1339 = vmul.f32 %v1268, %v1338
        %v1340 = vsub.f32 1.0, %v1339
        %v1341 = vmul.f32 %v1338, %v1340
        %v1342 = vadd.f32 %v1338, %v1341
        %vm1343 = vweird.f32 %v1268
        %vm1344 = vweird.f32 %v1338
        %vm1345 = vmor %vm1343, %vm1344
        %v1346 = vsel %vm1345, %v1338, %v1342
        %v1347 = vand.u32 2147483647, %v1268
        %vm1348 = vcmp.eq.f32.partialorder %v1347, 8.507059e+37
        %v1349 = vand.u32 %v1268, 2147483648
        %v1350 = vor.u32 1.1754944e-38, %v1349
        %v1351 = vsel %vm1348, %v1350, %v1346
        %v1352 = vmul.f32 %v1236, %v1351
        %v1353 = vrcp.pop %v1270
        %v1354 = vmul.f32 %v1270, %v1353
        %v1355 = vsub.f32 1.0, %v1354
        %v1356 = vmul.f32 %v1353, %v1355
        %v1357 = vadd.f32 %v1353, %v1356
        %vm1358 = vweird.f32 %v1270
        %vm1359 = vweird.f32 %v1353
        %vm1360 = vmor %vm1358, %vm1359
        %v1361 = vsel %vm1360, %v1353, %v1357
        %v1362 = vand.u32 2147483647, %v1270
        %vm1363 = vcmp.eq.f32.partialorder %v1362, 8.507059e+37
        %v1364 = vand.u32 %v1270, 2147483648
        %v1365 = vor.u32 1.1754944e-38, %v1364
        %v1366 = vsel %vm1363, %v1365, %v1361
        %v1367 = vmul.f32 %v1238, %v1366
        %v1368 = vrcp.pop %v1272
        %v1369 = vmul.f32 %v1272, %v1368
        %v1370 = vsub.f32 1.0, %v1369
        %v1371 = vmul.f32 %v1368, %v1370
        %v1372 = vadd.f32 %v1368, %v1371
        %vm1373 = vweird.f32 %v1272
        %vm1374 = vweird.f32 %v1368
        %vm1375 = vmor %vm1373, %vm1374
        %v1376 = vsel %vm1375, %v1368, %v1372
        %v1377 = vand.u32 2147483647, %v1272
        %vm1378 = vcmp.eq.f32.partialorder %v1377, 8.507059e+37
        %v1379 = vand.u32 %v1272, 2147483648
        %v1380 = vor.u32 1.1754944e-38, %v1379
        %v1381 = vsel %vm1378, %v1380, %v1376
        %v1382 = vmul.f32 %v1240, %v1381
        %v1383 = vrcp.pop %v1274
        %v1384 = vmul.f32 %v1274, %v1383
        %v1385 = vsub.f32 1.0, %v1384
        %v1386 = vmul.f32 %v1383, %v1385
        %v1387 = vadd.f32 %v1383, %v1386
        %vm1388 = vweird.f32 %v1274
        %vm1389 = vweird.f32 %v1383
        %vm1390 = vmor %vm1388, %vm1389
        %v1391 = vsel %vm1390, %v1383, %v1387
        %v1392 = vand.u32 2147483647, %v1274
        %vm1393 = vcmp.eq.f32.partialorder %v1392, 8.507059e+37
        %v1394 = vand.u32 %v1274, 2147483648
        %v1395 = vor.u32 1.1754944e-38, %v1394
        %v1396 = vsel %vm1393, %v1395, %v1391
        %v1397 = vmul.f32 %v1242, %v1396
        %v1398 = vrcp.pop %v1276
        %v1399 = vmul.f32 %v1276, %v1398
        %v1400 = vsub.f32 1.0, %v1399
        %v1401 = vmul.f32 %v1398, %v1400
        %v1402 = vadd.f32 %v1398, %v1401
        %vm1403 = vweird.f32 %v1276
        %vm1404 = vweird.f32 %v1398
        %vm1405 = vmor %vm1403, %vm1404
        %v1406 = vsel %vm1405, %v1398, %v1402
        %v1407 = vand.u32 2147483647, %v1276
        %vm1408 = vcmp.eq.f32.partialorder %v1407, 8.507059e+37
        %v1409 = vand.u32 %v1276, 2147483648
        %v1410 = vor.u32 1.1754944e-38, %v1409
        %v1411 = vsel %vm1408, %v1410, %v1406
        %v1412 = vmul.f32 %v1244, %v1411
        %v1413 = vrcp.pop %v1278
        %v1414 = vmul.f32 %v1278, %v1413
        %v1415 = vsub.f32 1.0, %v1414
        %v1416 = vmul.f32 %v1413, %v1415
        %v1417 = vadd.f32 %v1413, %v1416
        %vm1418 = vweird.f32 %v1278
        %vm1419 = vweird.f32 %v1413
        %vm1420 = vmor %vm1418, %vm1419
        %v1421 = vsel %vm1420, %v1413, %v1417
        %v1422 = vand.u32 2147483647, %v1278
        %vm1423 = vcmp.eq.f32.partialorder %v1422, 8.507059e+37
        %v1424 = vand.u32 %v1278, 2147483648
        %v1425 = vor.u32 1.1754944e-38, %v1424
        %v1426 = vsel %vm1423, %v1425, %v1421
        %v1427 = vmul.f32 %v1246, %v1426
        %v1428 = vrcp.pop %v1280
        %v1429 = vmul.f32 %v1280, %v1428
        %v1430 = vsub.f32 1.0, %v1429
        %v1431 = vmul.f32 %v1428, %v1430
        %v1432 = vadd.f32 %v1428, %v1431
        %vm1433 = vweird.f32 %v1280
        %vm1434 = vweird.f32 %v1428
        %vm1435 = vmor %vm1433, %vm1434
        %v1436 = vsel %vm1435, %v1428, %v1432
        %v1437 = vand.u32 2147483647, %v1280
        %vm1438 = vcmp.eq.f32.partialorder %v1437, 8.507059e+37
        %v1439 = vand.u32 %v1280, 2147483648
        %v1440 = vor.u32 1.1754944e-38, %v1439
        %v1441 = vsel %vm1438, %v1440, %v1436
        %v1442 = vmul.f32 %v1248, %v1441
        %v1443 = vrcp.pop %v1282
        %v1444 = vmul.f32 %v1282, %v1443
        %v1445 = vsub.f32 1.0, %v1444
        %v1446 = vmul.f32 %v1443, %v1445
        %v1447 = vadd.f32 %v1443, %v1446
        %vm1448 = vweird.f32 %v1282
        %vm1449 = vweird.f32 %v1443
        %vm1450 = vmor %vm1448, %vm1449
        %v1451 = vsel %vm1450, %v1443, %v1447
        %v1452 = vand.u32 2147483647, %v1282
        %vm1453 = vcmp.eq.f32.partialorder %v1452, 8.507059e+37
        %v1454 = vand.u32 %v1282, 2147483648
        %v1455 = vor.u32 1.1754944e-38, %v1454
        %v1456 = vsel %vm1453, %v1455, %v1451
        %v1457 = vmul.f32 %v1250, %v1456
        %v1458 = vrcp.pop %v1284
        %v1459 = vmul.f32 %v1284, %v1458
        %v1460 = vsub.f32 1.0, %v1459
        %v1461 = vmul.f32 %v1458, %v1460
        %v1462 = vadd.f32 %v1458, %v1461
        %vm1463 = vweird.f32 %v1284
        %vm1464 = vweird.f32 %v1458
        %vm1465 = vmor %vm1463, %vm1464
        %v1466 = vsel %vm1465, %v1458, %v1462
        %v1467 = vand.u32 2147483647, %v1284
        %vm1468 = vcmp.eq.f32.partialorder %v1467, 8.507059e+37
        %v1469 = vand.u32 %v1284, 2147483648
        %v1470 = vor.u32 1.1754944e-38, %v1469
        %v1471 = vsel %vm1468, %v1470, %v1466
        %v1472 = vmul.f32 %v1252, %v1471
        %v1473 = vrcp.pop %v1286
        %v1474 = vmul.f32 %v1286, %v1473
        %v1475 = vsub.f32 1.0, %v1474
        %v1476 = vmul.f32 %v1473, %v1475
        %v1477 = vadd.f32 %v1473, %v1476
        %vm1478 = vweird.f32 %v1286
        %vm1479 = vweird.f32 %v1473
        %vm1480 = vmor %vm1478, %vm1479
        %v1481 = vsel %vm1480, %v1473, %v1477
        %v1482 = vand.u32 2147483647, %v1286
        %vm1483 = vcmp.eq.f32.partialorder %v1482, 8.507059e+37
        %v1484 = vand.u32 %v1286, 2147483648
        %v1485 = vor.u32 1.1754944e-38, %v1484
        %v1486 = vsel %vm1483, %v1485, %v1481
        %v1487 = vmul.f32 %v1254, %v1486
        %v1488 = vrcp.pop %v1288
        %v1489 = vmul.f32 %v1288, %v1488
        %v1490 = vsub.f32 1.0, %v1489
        %v1491 = vmul.f32 %v1488, %v1490
        %v1492 = vadd.f32 %v1488, %v1491
        %vm1493 = vweird.f32 %v1288
        %vm1494 = vweird.f32 %v1488
        %vm1495 = vmor %vm1493, %vm1494
        %v1496 = vsel %vm1495, %v1488, %v1492
        %v1497 = vand.u32 2147483647, %v1288
        %vm1498 = vcmp.eq.f32.partialorder %v1497, 8.507059e+37
        %v1499 = vand.u32 %v1288, 2147483648
        %v1500 = vor.u32 1.1754944e-38, %v1499
        %v1501 = vsel %vm1498, %v1500, %v1496
        %v1502 = vmul.f32 %v1256, %v1501
        %v1503 = vrcp.pop %v1290
        %v1504 = vmul.f32 %v1290, %v1503
        %v1505 = vsub.f32 1.0, %v1504
        %v1506 = vmul.f32 %v1503, %v1505
        %v1507 = vadd.f32 %v1503, %v1506
        %vm1508 = vweird.f32 %v1290
        %vm1509 = vweird.f32 %v1503
        %vm1510 = vmor %vm1508, %vm1509
        %v1511 = vsel %vm1510, %v1503, %v1507
        %v1512 = vand.u32 2147483647, %v1290
        %vm1513 = vcmp.eq.f32.partialorder %v1512, 8.507059e+37
        %v1514 = vand.u32 %v1290, 2147483648
        %v1515 = vor.u32 1.1754944e-38, %v1514
        %v1516 = vsel %vm1513, %v1515, %v1511
        %v1517 = vmul.f32 %v1258, %v1516
        %v1518 = vrcp.pop %v1292
        %v1519 = vmul.f32 %v1292, %v1518
        %v1520 = vsub.f32 1.0, %v1519
        %v1521 = vmul.f32 %v1518, %v1520
        %v1522 = vadd.f32 %v1518, %v1521
        %vm1523 = vweird.f32 %v1292
        %vm1524 = vweird.f32 %v1518
        %vm1525 = vmor %vm1523, %vm1524
        %v1526 = vsel %vm1525, %v1518, %v1522
        %v1527 = vand.u32 2147483647, %v1292
        %vm1528 = vcmp.eq.f32.partialorder %v1527, 8.507059e+37
        %v1529 = vand.u32 %v1292, 2147483648
        %v1530 = vor.u32 1.1754944e-38, %v1529
        %v1531 = vsel %vm1528, %v1530, %v1526
        %v1532 = vmul.f32 %v1260, %v1531
        %1533 = vmatpush.msra.mxu0 %v1098
        %1534 = vmatpush.msra.mxu0 %v1095
        %1535 = vmatpush.msra.mxu0 %v1092
        %1536 = vmatpush.msra.mxu0 %v1089
        %1537 = vmatpush.msra.mxu0 %v1086
        %1538 = vmatpush.msra.mxu0 %v1083
        %1539 = vmatpush.msra.mxu0 %v1080
        %1540 = vmatpush.msra.mxu0 %v1077
        %1541 = vmatpush.msra.mxu0 %v1074
        %1542 = vmatpush.msra.mxu0 %v1071
        %1543 = vmatpush.msra.mxu0 %v1068
        %1544 = vmatpush.msra.mxu0 %v1065
        %1545 = vmatpush.msra.mxu0 %v1062
        %1546 = vmatpush.msra.mxu0 %v1059
        %1547 = vmatpush.msra.mxu0 %v1056
        %1548 = vmatpush.msra.mxu0 %v1053
        %1549 = vmatmul.f32.gmra.mxu0 %v1307
        %v1550 = vpop.f32.mrf.mxu0
        %v1551 = vadd.f32 0.0, %v1550
        %1552 = vmatmul.f32.gmra.mxu0 %v1322
        %v1553 = vpop.f32.mrf.mxu0
        %v1554 = vadd.f32 0.0, %v1553
        %1555 = vmatmul.f32.gmra.mxu0 %v1337
        %v1556 = vpop.f32.mrf.mxu0
        %v1557 = vadd.f32 0.0, %v1556
        %1558 = vmatmul.f32.gmra.mxu0 %v1352
        %v1559 = vpop.f32.mrf.mxu0
        %v1560 = vadd.f32 0.0, %v1559
        %1561 = vmatmul.f32.gmra.mxu0 %v1367
        %v1562 = vpop.f32.mrf.mxu0
        %v1563 = vadd.f32 0.0, %v1562
        %1564 = vmatmul.f32.gmra.mxu0 %v1382
        %v1565 = vpop.f32.mrf.mxu0
        %v1566 = vadd.f32 0.0, %v1565
        %1567 = vmatmul.f32.gmra.mxu0 %v1397
        %v1568 = vpop.f32.mrf.mxu0
        %v1569 = vadd.f32 0.0, %v1568
        %1570 = vmatmul.f32.gmra.mxu0 %v1412
        %v1571 = vpop.f32.mrf.mxu0
        %v1572 = vadd.f32 0.0, %v1571
        %1573 = vmatmul.f32.gmra.mxu0 %v1427
        %v1574 = vpop.f32.mrf.mxu0
        %v1575 = vadd.f32 0.0, %v1574
        %1576 = vmatmul.f32.gmra.mxu0 %v1442
        %v1577 = vpop.f32.mrf.mxu0
        %v1578 = vadd.f32 0.0, %v1577
        %1579 = vmatmul.f32.gmra.mxu0 %v1457
        %v1580 = vpop.f32.mrf.mxu0
        %v1581 = vadd.f32 0.0, %v1580
        %1582 = vmatmul.f32.gmra.mxu0 %v1472
        %v1583 = vpop.f32.mrf.mxu0
        %v1584 = vadd.f32 0.0, %v1583
        %1585 = vmatmul.f32.gmra.mxu0 %v1487
        %v1586 = vpop.f32.mrf.mxu0
        %v1587 = vadd.f32 0.0, %v1586
        %1588 = vmatmul.f32.gmra.mxu0 %v1502
        %v1589 = vpop.f32.mrf.mxu0
        %v1590 = vadd.f32 0.0, %v1589
        %1591 = vmatmul.f32.gmra.mxu0 %v1517
        %v1592 = vpop.f32.mrf.mxu0
        %v1593 = vadd.f32 0.0, %v1592
        %1594 = vmatmul.f32.gmra.mxu0 %v1532
        %v1595 = vpop.f32.mrf.mxu0
        %v1596 = vadd.f32 0.0, %v1595
        %1597 = vdwg.mxu0
        %v1598 = vld [vmem:[#allocation2] sm:$0xff]
        %v1599 = vld [vmem:[#allocation2 + $0x8] sm:$0xff]
        %v1600 = vld [vmem:[#allocation2 + $0x10] sm:$0xff]
        %v1601 = vld [vmem:[#allocation2 + $0x18] sm:$0xff]
        %v1602 = vld [vmem:[#allocation2 + $0x20] sm:$0xff]
        %v1603 = vld [vmem:[#allocation2 + $0x28] sm:$0xff]
        %v1604 = vld [vmem:[#allocation2 + $0x30] sm:$0xff]
        %v1605 = vld [vmem:[#allocation2 + $0x38] sm:$0xff]
        %v1606 = vld [vmem:[#allocation2 + $0x40] sm:$0xff]
        %v1607 = vld [vmem:[#allocation2 + $0x48] sm:$0xff]
        %v1608 = vld [vmem:[#allocation2 + $0x50] sm:$0xff]
        %v1609 = vld [vmem:[#allocation2 + $0x58] sm:$0xff]
        %v1610 = vld [vmem:[#allocation2 + $0x60] sm:$0xff]
        %v1611 = vld [vmem:[#allocation2 + $0x68] sm:$0xff]
        %v1612 = vld [vmem:[#allocation2 + $0x70] sm:$0xff]
        %v1613 = vld [vmem:[#allocation2 + $0x78] sm:$0xff]
        %v1614 = vld [vmem:[#allocation2 + $0x80] sm:$0xff]
        %v1615 = vld [vmem:[#allocation2 + $0x88] sm:$0xff]
        %v1616 = vld [vmem:[#allocation2 + $0x90] sm:$0xff]
        %v1617 = vld [vmem:[#allocation2 + $0x98] sm:$0xff]
        %v1618 = vld [vmem:[#allocation2 + $0xa0] sm:$0xff]
        %v1619 = vld [vmem:[#allocation2 + $0xa8] sm:$0xff]
        %v1620 = vld [vmem:[#allocation2 + $0xb0] sm:$0xff]
        %v1621 = vld [vmem:[#allocation2 + $0xb8] sm:$0xff]
        %v1622 = vld [vmem:[#allocation2 + $0xc0] sm:$0xff]
        %v1623 = vld [vmem:[#allocation2 + $0xc8] sm:$0xff]
        %v1624 = vld [vmem:[#allocation2 + $0xd0] sm:$0xff]
        %v1625 = vld [vmem:[#allocation2 + $0xd8] sm:$0xff]
        %v1626 = vld [vmem:[#allocation2 + $0xe0] sm:$0xff]
        %v1627 = vld [vmem:[#allocation2 + $0xe8] sm:$0xff]
        %v1628 = vld [vmem:[#allocation2 + $0xf0] sm:$0xff]
        %v1629 = vld [vmem:[#allocation2 + $0xf8] sm:$0xff]
        %v1630 = vld [vmem:[%s456] sm:$0xff]
        %v1631 = vld [vmem:[%s456 + $0x8] sm:$0xff]
        %v1632 = vld [vmem:[%s456 + $0x10] sm:$0xff]
        %v1633 = vld [vmem:[%s456 + $0x18] sm:$0xff]
        %v1634 = vld [vmem:[%s456 + $0x20] sm:$0xff]
        %v1635 = vld [vmem:[%s456 + $0x28] sm:$0xff]
        %v1636 = vld [vmem:[%s456 + $0x30] sm:$0xff]
        %v1637 = vld [vmem:[%s456 + $0x38] sm:$0xff]
        %v1638 = vld [vmem:[%s456 + $0x40] sm:$0xff]
        %v1639 = vld [vmem:[%s456 + $0x48] sm:$0xff]
        %v1640 = vld [vmem:[%s456 + $0x50] sm:$0xff]
        %v1641 = vld [vmem:[%s456 + $0x58] sm:$0xff]
        %v1642 = vld [vmem:[%s456 + $0x60] sm:$0xff]
        %v1643 = vld [vmem:[%s456 + $0x68] sm:$0xff]
        %v1644 = vld [vmem:[%s456 + $0x70] sm:$0xff]
        %v1645 = vld [vmem:[%s456 + $0x78] sm:$0xff]
        %v1646 = vld [vmem:[%s456 + $0x80] sm:$0xff]
        %v1647 = vld [vmem:[%s456 + $0x88] sm:$0xff]
        %v1648 = vld [vmem:[%s456 + $0x90] sm:$0xff]
        %v1649 = vld [vmem:[%s456 + $0x98] sm:$0xff]
        %v1650 = vld [vmem:[%s456 + $0xa0] sm:$0xff]
        %v1651 = vld [vmem:[%s456 + $0xa8] sm:$0xff]
        %v1652 = vld [vmem:[%s456 + $0xb0] sm:$0xff]
        %v1653 = vld [vmem:[%s456 + $0xb8] sm:$0xff]
        %v1654 = vld [vmem:[%s456 + $0xc0] sm:$0xff]
        %v1655 = vld [vmem:[%s456 + $0xc8] sm:$0xff]
        %v1656 = vld [vmem:[%s456 + $0xd0] sm:$0xff]
        %v1657 = vld [vmem:[%s456 + $0xd8] sm:$0xff]
        %v1658 = vld [vmem:[%s456 + $0xe0] sm:$0xff]
        %v1659 = vld [vmem:[%s456 + $0xe8] sm:$0xff]
        %v1660 = vld [vmem:[%s456 + $0xf0] sm:$0xff]
        %v1661 = vld [vmem:[%s456 + $0xf8] sm:$0xff]
        %1662 = vmatpush.msra.mxu0 %v1660
        %1663 = vmatpush.msra.mxu0 %v1658
        %1664 = vmatpush.msra.mxu0 %v1656
        %1665 = vmatpush.msra.mxu0 %v1654
        %1666 = vmatpush.msra.mxu0 %v1652
        %1667 = vmatpush.msra.mxu0 %v1650
        %1668 = vmatpush.msra.mxu0 %v1648
        %1669 = vmatpush.msra.mxu0 %v1646
        %1670 = vmatpush.msra.mxu0 %v1644
        %1671 = vmatpush.msra.mxu0 %v1642
        %1672 = vmatpush.msra.mxu0 %v1640
        %1673 = vmatpush.msra.mxu0 %v1638
        %1674 = vmatpush.msra.mxu0 %v1636
        %1675 = vmatpush.msra.mxu0 %v1634
        %1676 = vmatpush.msra.mxu0 %v1632
        %1677 = vmatpush.msra.mxu0 %v1630
        %1678 = vmatmul.f32.gmra.mxu0 %v1551
        %v1679 = vpop.f32.mrf.mxu0
        %v1680 = vadd.f32 0.0, %v1679
        %1681 = vmatmul.f32.gmra.mxu0 %v1554
        %v1682 = vpop.f32.mrf.mxu0
        %v1683 = vadd.f32 0.0, %v1682
        %1684 = vmatmul.f32.gmra.mxu0 %v1557
        %v1685 = vpop.f32.mrf.mxu0
        %v1686 = vadd.f32 0.0, %v1685
        %1687 = vmatmul.f32.gmra.mxu0 %v1560
        %v1688 = vpop.f32.mrf.mxu0
        %v1689 = vadd.f32 0.0, %v1688
        %1690 = vmatmul.f32.gmra.mxu0 %v1563
        %v1691 = vpop.f32.mrf.mxu0
        %v1692 = vadd.f32 0.0, %v1691
        %1693 = vmatmul.f32.gmra.mxu0 %v1566
        %v1694 = vpop.f32.mrf.mxu0
        %v1695 = vadd.f32 0.0, %v1694
        %1696 = vmatmul.f32.gmra.mxu0 %v1569
        %v1697 = vpop.f32.mrf.mxu0
        %v1698 = vadd.f32 0.0, %v1697
        %1699 = vmatmul.f32.gmra.mxu0 %v1572
        %v1700 = vpop.f32.mrf.mxu0
        %v1701 = vadd.f32 0.0, %v1700
        %1702 = vmatmul.f32.gmra.mxu0 %v1575
        %v1703 = vpop.f32.mrf.mxu0
        %v1704 = vadd.f32 0.0, %v1703
        %1705 = vmatmul.f32.gmra.mxu0 %v1578
        %v1706 = vpop.f32.mrf.mxu0
        %v1707 = vadd.f32 0.0, %v1706
        %1708 = vmatmul.f32.gmra.mxu0 %v1581
        %v1709 = vpop.f32.mrf.mxu0
        %v1710 = vadd.f32 0.0, %v1709
        %1711 = vmatmul.f32.gmra.mxu0 %v1584
        %v1712 = vpop.f32.mrf.mxu0
        %v1713 = vadd.f32 0.0, %v1712
        %1714 = vmatmul.f32.gmra.mxu0 %v1587
        %v1715 = vpop.f32.mrf.mxu0
        %v1716 = vadd.f32 0.0, %v1715
        %1717 = vmatmul.f32.gmra.mxu0 %v1590
        %v1718 = vpop.f32.mrf.mxu0
        %v1719 = vadd.f32 0.0, %v1718
        %1720 = vmatmul.f32.gmra.mxu0 %v1593
        %v1721 = vpop.f32.mrf.mxu0
        %v1722 = vadd.f32 0.0, %v1721
        %1723 = vmatmul.f32.gmra.mxu0 %v1596
        %v1724 = vpop.f32.mrf.mxu0
        %v1725 = vadd.f32 0.0, %v1724
        %1726 = vdwg.mxu0
        %1727 = vmatpush.msra.mxu0 %v1661
        %1728 = vmatpush.msra.mxu0 %v1659
        %1729 = vmatpush.msra.mxu0 %v1657
        %1730 = vmatpush.msra.mxu0 %v1655
        %1731 = vmatpush.msra.mxu0 %v1653
        %1732 = vmatpush.msra.mxu0 %v1651
        %1733 = vmatpush.msra.mxu0 %v1649
        %1734 = vmatpush.msra.mxu0 %v1647
        %1735 = vmatpush.msra.mxu0 %v1645
        %1736 = vmatpush.msra.mxu0 %v1643
        %1737 = vmatpush.msra.mxu0 %v1641
        %1738 = vmatpush.msra.mxu0 %v1639
        %1739 = vmatpush.msra.mxu0 %v1637
        %1740 = vmatpush.msra.mxu0 %v1635
        %1741 = vmatpush.msra.mxu0 %v1633
        %1742 = vmatpush.msra.mxu0 %v1631
        %1743 = vmatmul.f32.gmra.mxu0 %v1551
        %v1744 = vpop.f32.mrf.mxu0
        %v1745 = vadd.f32 0.0, %v1744
        %1746 = vmatmul.f32.gmra.mxu0 %v1554
        %v1747 = vpop.f32.mrf.mxu0
        %v1748 = vadd.f32 0.0, %v1747
        %1749 = vmatmul.f32.gmra.mxu0 %v1557
        %v1750 = vpop.f32.mrf.mxu0
        %v1751 = vadd.f32 0.0, %v1750
        %1752 = vmatmul.f32.gmra.mxu0 %v1560
        %v1753 = vpop.f32.mrf.mxu0
        %v1754 = vadd.f32 0.0, %v1753
        %1755 = vmatmul.f32.gmra.mxu0 %v1563
        %v1756 = vpop.f32.mrf.mxu0
        %v1757 = vadd.f32 0.0, %v1756
        %1758 = vmatmul.f32.gmra.mxu0 %v1566
        %v1759 = vpop.f32.mrf.mxu0
        %v1760 = vadd.f32 0.0, %v1759
        %1761 = vmatmul.f32.gmra.mxu0 %v1569
        %v1762 = vpop.f32.mrf.mxu0
        %v1763 = vadd.f32 0.0, %v1762
        %1764 = vmatmul.f32.gmra.mxu0 %v1572
        %v1765 = vpop.f32.mrf.mxu0
        %v1766 = vadd.f32 0.0, %v1765
        %1767 = vmatmul.f32.gmra.mxu0 %v1575
        %v1768 = vpop.f32.mrf.mxu0
        %v1769 = vadd.f32 0.0, %v1768
        %1770 = vmatmul.f32.gmra.mxu0 %v1578
        %v1771 = vpop.f32.mrf.mxu0
        %v1772 = vadd.f32 0.0, %v1771
        %1773 = vmatmul.f32.gmra.mxu0 %v1581
        %v1774 = vpop.f32.mrf.mxu0
        %v1775 = vadd.f32 0.0, %v1774
        %1776 = vmatmul.f32.gmra.mxu0 %v1584
        %v1777 = vpop.f32.mrf.mxu0
        %v1778 = vadd.f32 0.0, %v1777
        %1779 = vmatmul.f32.gmra.mxu0 %v1587
        %v1780 = vpop.f32.mrf.mxu0
        %v1781 = vadd.f32 0.0, %v1780
        %1782 = vmatmul.f32.gmra.mxu0 %v1590
        %v1783 = vpop.f32.mrf.mxu0
        %v1784 = vadd.f32 0.0, %v1783
        %1785 = vmatmul.f32.gmra.mxu0 %v1593
        %v1786 = vpop.f32.mrf.mxu0
        %v1787 = vadd.f32 0.0, %v1786
        %1788 = vmatmul.f32.gmra.mxu0 %v1596
        %v1789 = vpop.f32.mrf.mxu0
        %v1790 = vadd.f32 0.0, %v1789
        %1791 = vdwg.mxu0
        %v1792 = vadd.f32 %v1598, %v1680
        %v1793 = vadd.f32 %v1599, %v1745
        %v1794 = vadd.f32 %v1600, %v1683
        %v1795 = vadd.f32 %v1601, %v1748
        %v1796 = vadd.f32 %v1602, %v1686
        %v1797 = vadd.f32 %v1603, %v1751
        %v1798 = vadd.f32 %v1604, %v1689
        %v1799 = vadd.f32 %v1605, %v1754
        %v1800 = vadd.f32 %v1606, %v1692
        %v1801 = vadd.f32 %v1607, %v1757
        %v1802 = vadd.f32 %v1608, %v1695
        %v1803 = vadd.f32 %v1609, %v1760
        %v1804 = vadd.f32 %v1610, %v1698
        %v1805 = vadd.f32 %v1611, %v1763
        %v1806 = vadd.f32 %v1612, %v1701
        %v1807 = vadd.f32 %v1613, %v1766
        %v1808 = vadd.f32 %v1614, %v1704
        %v1809 = vadd.f32 %v1615, %v1769
        %v1810 = vadd.f32 %v1616, %v1707
        %v1811 = vadd.f32 %v1617, %v1772
        %v1812 = vadd.f32 %v1618, %v1710
        %v1813 = vadd.f32 %v1619, %v1775
        %v1814 = vadd.f32 %v1620, %v1713
        %v1815 = vadd.f32 %v1621, %v1778
        %v1816 = vadd.f32 %v1622, %v1716
        %v1817 = vadd.f32 %v1623, %v1781
        %v1818 = vadd.f32 %v1624, %v1719
        %v1819 = vadd.f32 %v1625, %v1784
        %v1820 = vadd.f32 %v1626, %v1722
        %v1821 = vadd.f32 %v1627, %v1787
        %v1822 = vadd.f32 %v1628, %v1725
        %v1823 = vadd.f32 %v1629, %v1790
        %1824 = vst [vmem:[#allocation2] sm:$0xff] %v1792
        %1825 = vst [vmem:[#allocation2 + $0x8] sm:$0xff] %v1793
        %1826 = vst [vmem:[#allocation2 + $0x10] sm:$0xff] %v1794
        %1827 = vst [vmem:[#allocation2 + $0x18] sm:$0xff] %v1795
        %1828 = vst [vmem:[#allocation2 + $0x20] sm:$0xff] %v1796
        %1829 = vst [vmem:[#allocation2 + $0x28] sm:$0xff] %v1797
        %1830 = vst [vmem:[#allocation2 + $0x30] sm:$0xff] %v1798
        %1831 = vst [vmem:[#allocation2 + $0x38] sm:$0xff] %v1799
        %1832 = vst [vmem:[#allocation2 + $0x40] sm:$0xff] %v1800
        %1833 = vst [vmem:[#allocation2 + $0x48] sm:$0xff] %v1801
        %1834 = vst [vmem:[#allocation2 + $0x50] sm:$0xff] %v1802
        %1835 = vst [vmem:[#allocation2 + $0x58] sm:$0xff] %v1803
        %1836 = vst [vmem:[#allocation2 + $0x60] sm:$0xff] %v1804
        %1837 = vst [vmem:[#allocation2 + $0x68] sm:$0xff] %v1805
        %1838 = vst [vmem:[#allocation2 + $0x70] sm:$0xff] %v1806
        %1839 = vst [vmem:[#allocation2 + $0x78] sm:$0xff] %v1807
        %1840 = vst [vmem:[#allocation2 + $0x80] sm:$0xff] %v1808
        %1841 = vst [vmem:[#allocation2 + $0x88] sm:$0xff] %v1809
        %1842 = vst [vmem:[#allocation2 + $0x90] sm:$0xff] %v1810
        %1843 = vst [vmem:[#allocation2 + $0x98] sm:$0xff] %v1811
        %1844 = vst [vmem:[#allocation2 + $0xa0] sm:$0xff] %v1812
        %1845 = vst [vmem:[#allocation2 + $0xa8] sm:$0xff] %v1813
        %1846 = vst [vmem:[#allocation2 + $0xb0] sm:$0xff] %v1814
        %1847 = vst [vmem:[#allocation2 + $0xb8] sm:$0xff] %v1815
        %1848 = vst [vmem:[#allocation2 + $0xc0] sm:$0xff] %v1816
        %1849 = vst [vmem:[#allocation2 + $0xc8] sm:$0xff] %v1817
        %1850 = vst [vmem:[#allocation2 + $0xd0] sm:$0xff] %v1818
        %1851 = vst [vmem:[#allocation2 + $0xd8] sm:$0xff] %v1819
        %1852 = vst [vmem:[#allocation2 + $0xe0] sm:$0xff] %v1820
        %1853 = vst [vmem:[#allocation2 + $0xe8] sm:$0xff] %v1821
        %1854 = vst [vmem:[#allocation2 + $0xf0] sm:$0xff] %v1822
        %1855 = vst [vmem:[#allocation2 + $0xf8] sm:$0xff] %v1823
        %p1856 = scmp.eq.s32.totalorder %s38, 1
        // Predicated region
        $region77: #{tpu_custom_call.1} parent=47 // pred_check
          %p1857 = pneg %p1856
        $region78: #{tpu_custom_call.1} parent=47 // pred_check_branch
          %1859 = sbr.rel (%p1857) target = $region80
        $region79: #{tpu_custom_call.1} parent=47 // pred_region
          %v1860 = vld [vmem:[#allocation2] sm:$0xff]
          %v1861 = vld [vmem:[#allocation2 + $0x8] sm:$0xff]
          %v1862 = vld [vmem:[#allocation2 + $0x10] sm:$0xff]
          %v1863 = vld [vmem:[#allocation2 + $0x18] sm:$0xff]
          %v1864 = vld [vmem:[#allocation2 + $0x20] sm:$0xff]
          %v1865 = vld [vmem:[#allocation2 + $0x28] sm:$0xff]
          %v1866 = vld [vmem:[#allocation2 + $0x30] sm:$0xff]
          %v1867 = vld [vmem:[#allocation2 + $0x38] sm:$0xff]
          %v1868 = vld [vmem:[#allocation2 + $0x40] sm:$0xff]
          %v1869 = vld [vmem:[#allocation2 + $0x48] sm:$0xff]
          %v1870 = vld [vmem:[#allocation2 + $0x50] sm:$0xff]
          %v1871 = vld [vmem:[#allocation2 + $0x58] sm:$0xff]
          %v1872 = vld [vmem:[#allocation2 + $0x60] sm:$0xff]
          %v1873 = vld [vmem:[#allocation2 + $0x68] sm:$0xff]
          %v1874 = vld [vmem:[#allocation2 + $0x70] sm:$0xff]
          %v1875 = vld [vmem:[#allocation2 + $0x78] sm:$0xff]
          %v1876 = vld [vmem:[#allocation2 + $0x80] sm:$0xff]
          %v1877 = vld [vmem:[#allocation2 + $0x88] sm:$0xff]
          %v1878 = vld [vmem:[#allocation2 + $0x90] sm:$0xff]
          %v1879 = vld [vmem:[#allocation2 + $0x98] sm:$0xff]
          %v1880 = vld [vmem:[#allocation2 + $0xa0] sm:$0xff]
          %v1881 = vld [vmem:[#allocation2 + $0xa8] sm:$0xff]
          %v1882 = vld [vmem:[#allocation2 + $0xb0] sm:$0xff]
          %v1883 = vld [vmem:[#allocation2 + $0xb8] sm:$0xff]
          %v1884 = vld [vmem:[#allocation2 + $0xc0] sm:$0xff]
          %v1885 = vld [vmem:[#allocation2 + $0xc8] sm:$0xff]
          %v1886 = vld [vmem:[#allocation2 + $0xd0] sm:$0xff]
          %v1887 = vld [vmem:[#allocation2 + $0xd8] sm:$0xff]
          %v1888 = vld [vmem:[#allocation2 + $0xe0] sm:$0xff]
          %v1889 = vld [vmem:[#allocation2 + $0xe8] sm:$0xff]
          %v1890 = vld [vmem:[#allocation2 + $0xf0] sm:$0xff]
          %v1891 = vld [vmem:[#allocation2 + $0xf8] sm:$0xff]
          %v1892 = vld [vmem:[%s6] sm:$0x3]
          %v1894 = vperm.slane %v1892, 0
          %v1895 = vperm.slane %v1892, 1
          %v1898 = vadd.f32 %v1860, %v1894
          %v1899 = vadd.f32 %v1861, %v1895
          %v1900 = vadd.f32 %v1862, %v1894
          %v1901 = vadd.f32 %v1863, %v1895
          %v1902 = vadd.f32 %v1864, %v1894
          %v1903 = vadd.f32 %v1865, %v1895
          %v1904 = vadd.f32 %v1866, %v1894
          %v1905 = vadd.f32 %v1867, %v1895
          %v1906 = vadd.f32 %v1868, %v1894
          %v1907 = vadd.f32 %v1869, %v1895
          %v1908 = vadd.f32 %v1870, %v1894
          %v1909 = vadd.f32 %v1871, %v1895
          %v1910 = vadd.f32 %v1872, %v1894
          %v1911 = vadd.f32 %v1873, %v1895
          %v1912 = vadd.f32 %v1874, %v1894
          %v1913 = vadd.f32 %v1875, %v1895
          %v1914 = vadd.f32 %v1876, %v1894
          %v1915 = vadd.f32 %v1877, %v1895
          %v1916 = vadd.f32 %v1878, %v1894
          %v1917 = vadd.f32 %v1879, %v1895
          %v1918 = vadd.f32 %v1880, %v1894
          %v1919 = vadd.f32 %v1881, %v1895
          %v1920 = vadd.f32 %v1882, %v1894
          %v1921 = vadd.f32 %v1883, %v1895
          %v1922 = vadd.f32 %v1884, %v1894
          %v1923 = vadd.f32 %v1885, %v1895
          %v1924 = vadd.f32 %v1886, %v1894
          %v1925 = vadd.f32 %v1887, %v1895
          %v1926 = vadd.f32 %v1888, %v1894
          %v1927 = vadd.f32 %v1889, %v1895
          %v1928 = vadd.f32 %v1890, %v1894
          %v1929 = vadd.f32 %v1891, %v1895
          %1930 = vst [vmem:[%s512] sm:$0xff] %v1898
          %1931 = vst [vmem:[%s512 + $0x8] sm:$0xff] %v1899
          %1932 = vst [vmem:[%s512 + $0x10] sm:$0xff] %v1900
          %1933 = vst [vmem:[%s512 + $0x18] sm:$0xff] %v1901
          %1934 = vst [vmem:[%s512 + $0x20] sm:$0xff] %v1902
          %1935 = vst [vmem:[%s512 + $0x28] sm:$0xff] %v1903
          %1936 = vst [vmem:[%s512 + $0x30] sm:$0xff] %v1904
          %1937 = vst [vmem:[%s512 + $0x38] sm:$0xff] %v1905
          %1938 = vst [vmem:[%s512 + $0x40] sm:$0xff] %v1906
          %1939 = vst [vmem:[%s512 + $0x48] sm:$0xff] %v1907
          %1940 = vst [vmem:[%s512 + $0x50] sm:$0xff] %v1908
          %1941 = vst [vmem:[%s512 + $0x58] sm:$0xff] %v1909
          %1942 = vst [vmem:[%s512 + $0x60] sm:$0xff] %v1910
          %1943 = vst [vmem:[%s512 + $0x68] sm:$0xff] %v1911
          %1944 = vst [vmem:[%s512 + $0x70] sm:$0xff] %v1912
          %1945 = vst [vmem:[%s512 + $0x78] sm:$0xff] %v1913
          %1946 = vst [vmem:[%s512 + $0x80] sm:$0xff] %v1914
          %1947 = vst [vmem:[%s512 + $0x88] sm:$0xff] %v1915
          %1948 = vst [vmem:[%s512 + $0x90] sm:$0xff] %v1916
          %1949 = vst [vmem:[%s512 + $0x98] sm:$0xff] %v1917
          %1950 = vst [vmem:[%s512 + $0xa0] sm:$0xff] %v1918
          %1951 = vst [vmem:[%s512 + $0xa8] sm:$0xff] %v1919
          %1952 = vst [vmem:[%s512 + $0xb0] sm:$0xff] %v1920
          %1953 = vst [vmem:[%s512 + $0xb8] sm:$0xff] %v1921
          %1954 = vst [vmem:[%s512 + $0xc0] sm:$0xff] %v1922
          %1955 = vst [vmem:[%s512 + $0xc8] sm:$0xff] %v1923
          %1956 = vst [vmem:[%s512 + $0xd0] sm:$0xff] %v1924
          %1957 = vst [vmem:[%s512 + $0xd8] sm:$0xff] %v1925
          %1958 = vst [vmem:[%s512 + $0xe0] sm:$0xff] %v1926
          %1959 = vst [vmem:[%s512 + $0xe8] sm:$0xff] %v1927
          %1960 = vst [vmem:[%s512 + $0xf0] sm:$0xff] %v1928
          %1961 = vst [vmem:[%s512 + $0xf8] sm:$0xff] %v1929
        $region80: #{tpu_custom_call.1} parent=47 // pred_fallthru
          _
        %s1962 = sand.u32 %s230, 1
        %s1963 = scalar_lea.sflag [#allocation5], %s1962
        %s1964 = sand.u32 %s230, 1
        %s1965 = smul.addr %s1964, 256
        %s1966 = scalar_lea.vmem [#allocation14], %s1965
        // Predicated region
        $region81: #{tpu_custom_call.1} parent=47 // pred_check
          %p1967 = pneg %p240
        $region82: #{tpu_custom_call.1} parent=47 // pred_check_branch
          %1969 = sbr.rel (%p1967) target = $region84
        $region83: #{tpu_custom_call.1} parent=47 // pred_region
          %1971 = vsyncadd %s1963, 0
          %s1972 = smul.addr %s37, 32
          %s1973 = smul.addr %s1972, 8
          %s1974 = scalar_lea.hbm %s7, %s1973
          %s1975 = sshll.u32 %s1966, 4
          %s1976 = int_to_ptr.vmem [resolvable:$true] %s1975
          %s1977 = sshll.u32 %s1974, 4
          %s1978 = int_to_ptr.hbm [resolvable:$true] %s1977
          %1983 = dma.vmem_to_hbm [thread:$0]  %s1976, 4096, %s1978, %s1963, 256, 256, 16
        $region84: #{tpu_custom_call.1} parent=47 // pred_fallthru
          _
      $region48: #{tpu_custom_call.1} parent=5 // pred_fallthru
        _
      %p1984 = scmp.le.s32.totalorder 2, %s28
      // Predicated region
      $region85: #{tpu_custom_call.1} parent=5 // pred_check
        %p1985 = pneg %p1984
      $region86: #{tpu_custom_call.1} parent=5 // pred_check_branch
        %1987 = sbr.rel (%p1985) target = $region88
      $region87: #{tpu_custom_call.1} parent=5 // pred_region
        %s1988 = ssub.s32 %s28, 2
        // Predicated region
        $region89: #{tpu_custom_call.1} parent=87 // pred_check
          %p1989 = pneg %p246
        $region90: #{tpu_custom_call.1} parent=87 // pred_check_branch
          %1991 = sbr.rel (%p1989) target = $region92
        $region91: #{tpu_custom_call.1} parent=87 // pred_region
          %s1992 = sand.u32 %s231, 1
          %s1993 = scalar_lea.sflag [#allocation5], %s1992
          %s1994 = sand.u32 %s231, 1
          %s1995 = smul.addr %s1994, 256
          %s1996 = scalar_lea.vmem [#allocation14], %s1995
          %1998 = dma.done %s1993, 4096
        $region92: #{tpu_custom_call.1} parent=87 // pred_fallthru
          _
      $region88: #{tpu_custom_call.1} parent=5 // pred_fallthru
        _
    $region6: #{tpu_custom_call.1} parent=1 // loop_footer
      %s32 = sadd.s32 1, %s28
    $region7: #{tpu_custom_call.1} parent=1 // loop_footer_branch
      %27 = sbr.rel target = $region3
    $region8: #{tpu_custom_call.1} parent=1 // loop_exit
      _
    %1999 = vsyncpa [#allocation4], 1
    %s2000 = scalar_lea.sflag [#allocation4], 1
    %2001 = vsyncpa %s2000, 1
    %2002 = vsyncpa [#allocation7], 1
    %s2003 = scalar_lea.sflag [#allocation7], 1
    %2004 = vsyncpa %s2003, 1
    %2005 = vsyncpa [#allocation10], 1
    %s2006 = scalar_lea.sflag [#allocation10], 1
    %2007 = vsyncpa %s2006, 1
    %2008 = vsyncpa [#allocation13], 1
    %s2009 = scalar_lea.sflag [#allocation13], 1
    %2010 = vsyncpa %s2009, 1
    %2011 = vsyncpa [#allocation5], 1
    %s2012 = scalar_lea.sflag [#allocation5], 1
    %2013 = vsyncpa %s2012, 1

</llo_original>
